<compile_context>
chip_gen: v5e
topology: v5e:2x2
jax: 0.10.0
libtpu: 0.0.40
codegen_flags: <defaults>
</compile_context>

<pallas_src>
import jax
import jax.numpy as jnp
import numpy as np
from jax.experimental import pallas as pl
from jax.experimental.pallas import tpu as pltpu


# ---------------------------------------------------------------------------
# Pallas kernel: the entire forward pass
# ---------------------------------------------------------------------------
def one_sent2other_kernel(x_ref, w12_ref, w3_ref, bfcl_ref,
                          wigo_ref, bigo_ref,
                          wattn_ref, battn_ref,
                          wfc_ref, bfc_ref,
                          pred_ref):
    N, D = x_ref.shape
    x = x_ref[...]                      # (N, D) f32
    cdt = w12_ref.dtype                 # MXU compute dtype (bf16 or f32)

    # ---- pairwise stage: relu(FCL([X_i, X_j, |X_i - X_j|])) ---------------
    # X_i / X_other contributions factored into one N-row MXU pass.
    ab = jnp.dot(x.astype(cdt), w12_ref[...],
                 preferred_element_type=jnp.float32)            # (N, 2D) f32
    a = ab[:, :D] + bfcl_ref[...]       # target-sentence term + bias (folded)
    b = ab[:, D:]                       # other-sentence term

    # |X_i - X_j| for all pairs (i major, j minor) -> single N^2-row matmul.
    diff = jnp.abs(x[:, None, :] - x[None, :, :]).reshape(N * N, D)
    dw = jnp.dot(diff.astype(cdt), w3_ref[...],
                 preferred_element_type=jnp.float32).reshape(N, N, D)

    f = jnp.maximum(a[:, None, :] + b[None, :, :] + dw, 0.0)    # (N, N, D)

    # allowed(i, j): j != i, and for i == N-1 the original code also drops
    # j == N-2 (the X[:i-1] bug) -- reproduced exactly.  Mask built at (N, N)
    # and broadcast across lanes; zero-masking is exact since f >= 0 and every
    # row has at least one allowed column (N >= 3 asserted in the wrapper).
    ii = jax.lax.broadcasted_iota(jnp.int32, (N, N), 0)
    jj = jax.lax.broadcasted_iota(jnp.int32, (N, N), 1)
    allowed = (jj != ii) & jnp.logical_not((ii == N - 1) & (jj == N - 2))
    mask = allowed.astype(jnp.float32)[:, :, None]               # (N, N, 1)
    v = jnp.max(f * mask, axis=1)                                # (N, D)

    # ---- LSTM single step (seq_len=1, h0=c0=0): forget gate & W_hh dead ---
    gates = jnp.dot(v.astype(cdt), wigo_ref[...],
                    preferred_element_type=jnp.float32) + bigo_ref[...]  # (N,3D)
    i_g = 1.0 / (1.0 + jnp.exp(-gates[:, :D]))
    g_g = jnp.tanh(gates[:, D:2 * D])
    o_g = 1.0 / (1.0 + jnp.exp(-gates[:, 2 * D:]))
    h = o_g * jnp.tanh(i_g * g_g)                                # (N, D)

    # ---- attention: Linear(D,1) as VPU multiply + lane reduce -------------
    attn = jnp.sum(h * wattn_ref[...], axis=-1, keepdims=True) + battn_ref[...]
    out = jnp.sum(h * attn, axis=0, keepdims=True)               # (1, D)

    # ---- fc + sigmoid (VPU lane reduce, EUP exp) ---------------------------
    logit = jnp.sum(out * wfc_ref[...], axis=-1, keepdims=True) + bfc_ref[...]
    pred_ref[...] = 1.0 / (1.0 + jnp.exp(-logit))                # (1, 1)


# ---------------------------------------------------------------------------
# Parameter packing (done once, outside the hot path) + wrapper
# ---------------------------------------------------------------------------
def pack_params(params, compute_dtype=jnp.bfloat16):
    """Pre-transpose / merge / prune parameters into kernel layout."""
    D = params["b_fcl"].shape[-1]
    w_fcl = params["w_fcl"]                              # (3D, D): rows [Xi|Xother|absdiff]
    w12 = jnp.concatenate([w_fcl[:D], w_fcl[D:2 * D]], axis=1)   # (D, 2D)
    w3 = w_fcl[2 * D:]                                           # (D, D)

    w_ih = params["w_ih"]                                # (D, 4D), cols [i|f|g|o]
    b_l = params["b_ih"] + params["b_hh"]                # (1, 4D)
    # drop the dead forget gate (c0 = 0) and the entire W_hh (h0 = 0)
    w_igo = jnp.concatenate([w_ih[:, :D], w_ih[:, 2 * D:3 * D], w_ih[:, 3 * D:]], axis=1)
    b_igo = jnp.concatenate([b_l[:, :D], b_l[:, 2 * D:3 * D], b_l[:, 3 * D:]], axis=1)

    return {
        "w12": w12.astype(compute_dtype),
        "w3": w3.astype(compute_dtype),
        "b_fcl": params["b_fcl"],
        "w_igo": w_igo.astype(compute_dtype),
        "b_igo": b_igo,
        "w_attn": params["w_attn"], "b_attn": params["b_attn"],
        "w_fc": params["w_fc"], "b_fc": params["b_fc"],
    }


def one_sent2other_forward(X, packed):
    N, D = X.shape
    assert N >= 3, "kernel assumes every sentence has a non-empty 'other' set"
    vmem = pl.BlockSpec(memory_space=pltpu.MemorySpace.VMEM)
    return pl.pallas_call(
        one_sent2other_kernel,
        out_shape=jax.ShapeDtypeStruct((1, 1), jnp.float32),
        in_specs=[vmem] * 10,
        out_specs=vmem,
    )(X, packed["w12"], packed["w3"], packed["b_fcl"],
      packed["w_igo"], packed["b_igo"],
      packed["w_attn"], packed["b_attn"],
      packed["w_fc"], packed["b_fc"])


# ---------------------------------------------------------------------------
# Pure-JAX reference mirroring the PyTorch forward literally
# ---------------------------------------------------------------------------
def one_sent2other_reference(X, params):
    N, D = X.shape
    feats = []
    for i in range(N):
        X_i = X[i:i + 1]
        if i != 0 and i != N - 1:
            X_other = jnp.concatenate([X[:i], X[i + 1:]], axis=0)
        elif i == N - 1:
            X_other = X[:i - 1]          # original off-by-one kept
        else:                            # i == 0
            X_other = X[i + 1:]
        L = X_other.shape[0]
        if L == 0:
            continue
        Xi_rep = jnp.tile(X_i, (L, 1))
        cat = jnp.concatenate([Xi_rep, X_other, jnp.abs(Xi_rep - X_other)], axis=1)
        r = jax.nn.relu(cat @ params["w_fcl"] + params["b_fcl"])
        feats.append(jnp.max(r, axis=0, keepdims=True))
    V = jnp.concatenate(feats, axis=0)                       # (N, D)

    # LSTM single step, h0 = c0 = 0 (W_hh contributes nothing, biases do)
    gates = V @ params["w_ih"] + params["b_ih"] + params["b_hh"]
    i_g = jax.nn.sigmoid(gates[:, :D])
    g_g = jnp.tanh(gates[:, 2 * D:3 * D])
    o_g = jax.nn.sigmoid(gates[:, 3 * D:])
    h = o_g * jnp.tanh(i_g * g_g)                            # (N, D)

    attn = h @ params["w_attn"].T + params["b_attn"]         # (N, 1)
    out = jnp.sum(h * attn, axis=0, keepdims=True)           # (1, D)
    logit = out @ params["w_fc"].T + params["b_fc"]          # (1, 1)
    return jax.nn.sigmoid(logit)


# ---------------------------------------------------------------------------
# Deterministic PyTorch-style init
# ---------------------------------------------------------------------------
def init_params(D, key):
    ks = jax.random.split(key, 9)

    def unif(k, shape, bound):
        return jax.random.uniform(k, shape, jnp.float32, -bound, bound)

    b3 = 1.0 / np.sqrt(3 * D)
    bd = 1.0 / np.sqrt(D)
    return {
        # single_sent2other_sent_FCL (3D -> D), pre-transposed (in, out)
        "w_fcl": unif(ks[0], (3 * D, D), b3),
        "b_fcl": unif(ks[1], (1, D), b3),
        # LSTM(D, D): W_ih^T (D, 4D) cols [i|f|g|o]; W_hh is dead (h0 = 0)
        "w_ih": unif(ks[2], (D, 4 * D), bd),
        "b_ih": unif(ks[3], (1, 4 * D), bd),
        "b_hh": unif(ks[4], (1, 4 * D), bd),
        # attention_weight (D -> 1) and fc (D -> 1), stored as (1, D) rows
        "w_attn": unif(ks[5], (1, D), bd),
        "b_attn": unif(ks[6], (1, 1), bd),
        "w_fc": unif(ks[7], (1, D), bd),
        "b_fc": unif(ks[8], (1, 1), bd),
    }


if __name__ == "__main__":
    N, D = 8, 256                      # 8 sentences; module hard-codes input_dim=256

    key = jax.random.PRNGKey(0)
    kx, kp = jax.random.split(key)
    X = jax.random.normal(kx, (N, D), jnp.float32)
    params = init_params(D, kp)

    ref = one_sent2other_reference(X, params)

    # 1) f32 MXU path: tight semantic check (diffs only from summation order /
    #    matmul pass decomposition).
    pred_f32 = jax.block_until_ready(
        one_sent2other_forward(X, pack_params(params, jnp.float32)))
    assert pred_f32.shape == (1, 1)
    np.testing.assert_allclose(np.asarray(pred_f32), np.asarray(ref),
                               rtol=1e-3, atol=1e-4)

    # 2) bf16-operand MXU path (default perf config), f32 accumulation.
    pred_bf16 = jax.block_until_ready(
        one_sent2other_forward(X, pack_params(params, jnp.bfloat16)))
    np.testing.assert_allclose(np.asarray(pred_bf16), np.asarray(ref),
                               rtol=5e-2, atol=1e-2)

    # TODO(synk): the PyTorch forward's debug `print(X_i)` side effect is not
    # reproduced (pure compute only).
    print("KERNEL_OK")
</pallas_src>

<mosaic_0001>
module attributes {stable_mosaic.version = 11 : i64} {
  func.func @one_sent2other_kernel(%arg0: memref<8x256xf32, #tpu.memory_space<vmem>>, %arg1: memref<256x512xf32, #tpu.memory_space<vmem>>, %arg2: memref<256x256xf32, #tpu.memory_space<vmem>>, %arg3: memref<1x256xf32, #tpu.memory_space<vmem>>, %arg4: memref<256x768xf32, #tpu.memory_space<vmem>>, %arg5: memref<1x768xf32, #tpu.memory_space<vmem>>, %arg6: memref<1x256xf32, #tpu.memory_space<vmem>>, %arg7: memref<1x1xf32, #tpu.memory_space<vmem>>, %arg8: memref<1x256xf32, #tpu.memory_space<vmem>>, %arg9: memref<1x1xf32, #tpu.memory_space<vmem>>, %arg10: memref<1x1xf32, #tpu.memory_space<vmem>>) attributes {dimension_semantics = [], scalar_prefetch = 0 : i64, scratch_operands = 0 : i64, tpu.core_type = #tpu.core_type<tc>} {
    %c0 = arith.constant 0 : index
    %c0_0 = arith.constant 0 : index
    %0 = vector.load %arg0[%c0, %c0_0] : memref<8x256xf32, #tpu.memory_space<vmem>>, vector<8x256xf32>
    %c0_1 = arith.constant 0 : index
    %c0_2 = arith.constant 0 : index
    %1 = vector.load %arg1[%c0_1, %c0_2] : memref<256x512xf32, #tpu.memory_space<vmem>>, vector<256x512xf32>
    %cst = arith.constant dense<0.000000e+00> : vector<8x512xf32>
    %2 = tpu.matmul %0, %1, %cst {dimension_numbers = #tpu.dot_dimension_numbers<[1], [0], [0], [1], [0, 0, 1, 1], [], []>} : vector<8x256xf32>, vector<256x512xf32>, vector<8x512xf32> -> vector<8x512xf32>
    %3 = vector.extract_strided_slice %2 {offsets = [0, 0], sizes = [8, 256], strides = [1, 1]} : vector<8x512xf32> to vector<8x256xf32>
    %c0_3 = arith.constant 0 : index
    %c0_4 = arith.constant 0 : index
    %4 = vector.load %arg3[%c0_3, %c0_4] : memref<1x256xf32, #tpu.memory_space<vmem>>, vector<1x256xf32>
    %5 = vector.broadcast %4 : vector<1x256xf32> to vector<8x256xf32>
    %6 = arith.addf %3, %5 : vector<8x256xf32>
    %7 = vector.extract_strided_slice %2 {offsets = [0, 256], sizes = [8, 256], strides = [1, 1]} : vector<8x512xf32> to vector<8x256xf32>
    %8 = vector.shape_cast %0 : vector<8x256xf32> to vector<8x1x256xf32>
    %9 = vector.shape_cast %0 : vector<8x256xf32> to vector<1x8x256xf32>
    %10 = vector.broadcast %8 : vector<8x1x256xf32> to vector<8x8x256xf32>
    %11 = vector.broadcast %9 : vector<1x8x256xf32> to vector<8x8x256xf32>
    %12 = arith.subf %10, %11 : vector<8x8x256xf32>
    %13 = math.absf %12 : vector<8x8x256xf32>
    %14 = vector.shape_cast %13 : vector<8x8x256xf32> to vector<64x256xf32>
    %c0_5 = arith.constant 0 : index
    %c0_6 = arith.constant 0 : index
    %15 = vector.load %arg2[%c0_5, %c0_6] : memref<256x256xf32, #tpu.memory_space<vmem>>, vector<256x256xf32>
    %cst_7 = arith.constant dense<0.000000e+00> : vector<64x256xf32>
    %16 = tpu.matmul %14, %15, %cst_7 {dimension_numbers = #tpu.dot_dimension_numbers<[1], [0], [0], [1], [0, 0, 1, 1], [], []>} : vector<64x256xf32>, vector<256x256xf32>, vector<64x256xf32> -> vector<64x256xf32>
    %17 = vector.shape_cast %16 : vector<64x256xf32> to vector<8x8x256xf32>
    %18 = vector.shape_cast %6 : vector<8x256xf32> to vector<8x1x256xf32>
    %19 = vector.shape_cast %7 : vector<8x256xf32> to vector<1x8x256xf32>
    %20 = vector.broadcast %18 : vector<8x1x256xf32> to vector<8x8x256xf32>
    %21 = vector.broadcast %19 : vector<1x8x256xf32> to vector<8x8x256xf32>
    %22 = arith.addf %20, %21 : vector<8x8x256xf32>
    %23 = arith.addf %22, %17 : vector<8x8x256xf32>
    %cst_8 = arith.constant 0.000000e+00 : f32
    %24 = vector.broadcast %cst_8 : f32 to vector<8x8x256xf32>
    %25 = arith.maximumf %23, %24 : vector<8x8x256xf32>
    %26 = tpu.iota {dimensions = array<i32: 0>} : vector<8x8xi32>
    %27 = tpu.iota {dimensions = array<i32: 1>} : vector<8x8xi32>
    %28 = arith.cmpi ne, %27, %26 : vector<8x8xi32>
    %c7_i32 = arith.constant 7 : i32
    %29 = vector.broadcast %c7_i32 : i32 to vector<8x8xi32>
    %30 = arith.cmpi eq, %26, %29 : vector<8x8xi32>
    %c6_i32 = arith.constant 6 : i32
    %31 = vector.broadcast %c6_i32 : i32 to vector<8x8xi32>
    %32 = arith.cmpi eq, %27, %31 : vector<8x8xi32>
    %33 = arith.andi %30, %32 : vector<8x8xi1>
    %cst_9 = arith.constant dense<true> : vector<8x8xi1>
    %34 = arith.xori %33, %cst_9 : vector<8x8xi1>
    %35 = arith.andi %28, %34 : vector<8x8xi1>
    %36 = arith.extui %35 : vector<8x8xi1> to vector<8x8xi32>
    %37 = arith.sitofp %36 : vector<8x8xi32> to vector<8x8xf32>
    %38 = vector.shape_cast %37 : vector<8x8xf32> to vector<8x8x1xf32>
    %39 = vector.broadcast %38 : vector<8x8x1xf32> to vector<8x8x256xf32>
    %40 = arith.mulf %25, %39 : vector<8x8x256xf32>
    %cst_10 = arith.constant dense<0xFF800000> : vector<8x256xf32>
    %41 = vector.multi_reduction <maximumf>, %40, %cst_10 [1] : vector<8x8x256xf32> to vector<8x256xf32>
    %c0_11 = arith.constant 0 : index
    %c0_12 = arith.constant 0 : index
    %42 = vector.load %arg4[%c0_11, %c0_12] : memref<256x768xf32, #tpu.memory_space<vmem>>, vector<256x768xf32>
    %cst_13 = arith.constant dense<0.000000e+00> : vector<8x768xf32>
    %43 = tpu.matmul %41, %42, %cst_13 {dimension_numbers = #tpu.dot_dimension_numbers<[1], [0], [0], [1], [0, 0, 1, 1], [], []>} : vector<8x256xf32>, vector<256x768xf32>, vector<8x768xf32> -> vector<8x768xf32>
    %c0_14 = arith.constant 0 : index
    %c0_15 = arith.constant 0 : index
    %44 = vector.load %arg5[%c0_14, %c0_15] : memref<1x768xf32, #tpu.memory_space<vmem>>, vector<1x768xf32>
    %45 = vector.broadcast %44 : vector<1x768xf32> to vector<8x768xf32>
    %46 = arith.addf %43, %45 : vector<8x768xf32>
    %47 = vector.extract_strided_slice %46 {offsets = [0, 0], sizes = [8, 256], strides = [1, 1]} : vector<8x768xf32> to vector<8x256xf32>
    %cst_16 = arith.constant 0.000000e+00 : f32
    %48 = vector.broadcast %cst_16 : f32 to vector<8x256xf32>
    %49 = arith.subf %48, %47 : vector<8x256xf32>
    %50 = math.exp %49 : vector<8x256xf32>
    %cst_17 = arith.constant 1.000000e+00 : f32
    %51 = vector.broadcast %cst_17 : f32 to vector<8x256xf32>
    %52 = arith.addf %51, %50 : vector<8x256xf32>
    %cst_18 = arith.constant 1.000000e+00 : f32
    %53 = vector.broadcast %cst_18 : f32 to vector<8x256xf32>
    %54 = arith.divf %53, %52 : vector<8x256xf32>
    %55 = vector.extract_strided_slice %46 {offsets = [0, 256], sizes = [8, 256], strides = [1, 1]} : vector<8x768xf32> to vector<8x256xf32>
    %56 = math.tanh %55 : vector<8x256xf32>
    %57 = vector.extract_strided_slice %46 {offsets = [0, 512], sizes = [8, 256], strides = [1, 1]} : vector<8x768xf32> to vector<8x256xf32>
    %cst_19 = arith.constant 0.000000e+00 : f32
    %58 = vector.broadcast %cst_19 : f32 to vector<8x256xf32>
    %59 = arith.subf %58, %57 : vector<8x256xf32>
    %60 = math.exp %59 : vector<8x256xf32>
    %cst_20 = arith.constant 1.000000e+00 : f32
    %61 = vector.broadcast %cst_20 : f32 to vector<8x256xf32>
    %62 = arith.addf %61, %60 : vector<8x256xf32>
    %cst_21 = arith.constant 1.000000e+00 : f32
    %63 = vector.broadcast %cst_21 : f32 to vector<8x256xf32>
    %64 = arith.divf %63, %62 : vector<8x256xf32>
    %65 = arith.mulf %54, %56 : vector<8x256xf32>
    %66 = math.tanh %65 : vector<8x256xf32>
    %67 = arith.mulf %64, %66 : vector<8x256xf32>
    %c0_22 = arith.constant 0 : index
    %c0_23 = arith.constant 0 : index
    %68 = vector.load %arg6[%c0_22, %c0_23] : memref<1x256xf32, #tpu.memory_space<vmem>>, vector<1x256xf32>
    %69 = vector.broadcast %68 : vector<1x256xf32> to vector<8x256xf32>
    %70 = arith.mulf %67, %69 : vector<8x256xf32>
    %cst_24 = arith.constant dense<0.000000e+00> : vector<8xf32>
    %71 = vector.multi_reduction <add>, %70, %cst_24 [1] : vector<8x256xf32> to vector<8xf32>
    %72 = vector.shape_cast %71 : vector<8xf32> to vector<8x1xf32>
    %c0_25 = arith.constant 0 : index
    %c0_26 = arith.constant 0 : index
    %73 = vector.load %arg7[%c0_25, %c0_26] : memref<1x1xf32, #tpu.memory_space<vmem>>, vector<1x1xf32>
    %74 = vector.broadcast %73 : vector<1x1xf32> to vector<8x1xf32>
    %75 = arith.addf %72, %74 : vector<8x1xf32>
    %76 = vector.broadcast %75 : vector<8x1xf32> to vector<8x256xf32>
    %77 = arith.mulf %67, %76 : vector<8x256xf32>
    %cst_27 = arith.constant dense<0.000000e+00> : vector<256xf32>
    %78 = vector.multi_reduction <add>, %77, %cst_27 [0] : vector<8x256xf32> to vector<256xf32>
    %79 = vector.shape_cast %78 : vector<256xf32> to vector<1x256xf32>
    %c0_28 = arith.constant 0 : index
    %c0_29 = arith.constant 0 : index
    %80 = vector.load %arg8[%c0_28, %c0_29] : memref<1x256xf32, #tpu.memory_space<vmem>>, vector<1x256xf32>
    %81 = arith.mulf %79, %80 : vector<1x256xf32>
    %cst_30 = arith.constant dense<0.000000e+00> : vector<1xf32>
    %82 = vector.multi_reduction <add>, %81, %cst_30 [1] : vector<1x256xf32> to vector<1xf32>
    %83 = vector.shape_cast %82 : vector<1xf32> to vector<1x1xf32>
    %c0_31 = arith.constant 0 : index
    %c0_32 = arith.constant 0 : index
    %84 = vector.load %arg9[%c0_31, %c0_32] : memref<1x1xf32, #tpu.memory_space<vmem>>, vector<1x1xf32>
    %85 = arith.addf %83, %84 : vector<1x1xf32>
    %cst_33 = arith.constant 0.000000e+00 : f32
    %86 = vector.broadcast %cst_33 : f32 to vector<1x1xf32>
    %87 = arith.subf %86, %85 : vector<1x1xf32>
    %88 = math.exp %87 : vector<1x1xf32>
    %cst_34 = arith.constant 1.000000e+00 : f32
    %89 = vector.broadcast %cst_34 : f32 to vector<1x1xf32>
    %90 = arith.addf %89, %88 : vector<1x1xf32>
    %cst_35 = arith.constant 1.000000e+00 : f32
    %91 = vector.broadcast %cst_35 : f32 to vector<1x1xf32>
    %92 = arith.divf %91, %90 : vector<1x1xf32>
    %c0_36 = arith.constant 0 : index
    %c0_37 = arith.constant 0 : index
    %93 = vector.load %arg10[%c0_36, %c0_37] : memref<1x1xf32, #tpu.memory_space<vmem>>, vector<1x1xf32>
    tpu.vector_store %arg10[%c0_36, %c0_37], %92 {strides = array<i32>} : memref<1x1xf32, #tpu.memory_space<vmem>>, vector<1x1xf32>,
    return
  }
}

</mosaic_0001>

<llo_original>
// kernel: tpu_custom_call.1
$region0: #{tpu_custom_call.1}
  #allocation0 [shape = 'u32[]', space=smem, size = 0x4, offset = 0x4, fixed_abs, tag = 'smem constant byte address 0x4 - core index']
  #allocation1 [shape = 'u32[72,128]{1,0:T(1,128)}', space=vmem, size = 0x9000, scoped, tag = 'internal scratch']
  #allocation2 [shape = 'f32[1,1]{1,0:T(1,128)S(1)}', space=vmem, size = 0x200, scoped, tag = 'scoped memory for tpu_custom_call.1']
  #allocation3 [shape = 'f32[1,1]{1,0:T(1,128)S(1)}', space=vmem, size = 0x200, scoped, tag = 'scoped memory for tpu_custom_call.1']
  %s0 = inlined_call_operand.hbm [shape: f32[8,256], index: 0, kind: input, shape index: {}]
  %s1 = inlined_call_operand.hbm [shape: f32[256,512], index: 1, kind: input, shape index: {}]
  %s2 = inlined_call_operand.hbm [shape: f32[256,256], index: 2, kind: input, shape index: {}]
  %s3 = inlined_call_operand.vmem [shape: f32[1,256], index: 3, kind: input, shape index: {}]
  %s4 = inlined_call_operand.hbm [shape: f32[256,768], index: 4, kind: input, shape index: {}]
  %s5 = inlined_call_operand.vmem [shape: f32[1,768], index: 5, kind: input, shape index: {}]
  %s6 = inlined_call_operand.hbm [shape: f32[1,256], index: 6, kind: input, shape index: {}]
  %s7 = inlined_call_operand.<no memory space> [shape: f32[1,1], index: 7, kind: input, shape index: {}]
  %s8 = inlined_call_operand.vmem [shape: f32[1,256], index: 8, kind: input, shape index: {}]
  %s9 = inlined_call_operand.<no memory space> [shape: f32[1,1], index: 9, kind: input, shape index: {}]
  %s10 = inlined_call_operand.hbm [shape: f32[1,1], index: 10, kind: output, shape index: {}]
  %s11 = sld [smem:[#allocation0]]
  $region70: #{tpu_custom_call.1} parent=0
    _
  %s13 = ssub.s32 1, %s11
  %s14 = scalar_select 0, %s13, %s11
  %v15 = vstv %s7
  %16 = vst [vmem:[#allocation2] sm:$0x1] %v15
  %v17 = vstv %s9
  %18 = vst [vmem:[#allocation3] sm:$0x1] %v17
  $region1: #{tpu_custom_call.1} parent=0
    #allocation4 [shape = 'u8[8192]{0}', space=vmem, size = 0x2000, scoped, tag = 'input window, operand 0, single buffered']
    #allocation5 [shape = 's32[1]{0}', space=sflag, size = 0x4, scoped, tag = 'scoped memory for tpu_custom_call.1']
    #allocation6 [shape = 's32[1]{0}', space=sflag, size = 0x4, scoped, tag = 'scoped memory for tpu_custom_call.1']
    #allocation7 [shape = 'u8[524288]{0}', space=vmem, size = 0x80000, scoped, tag = 'input window, operand 1, single buffered']
    #allocation8 [shape = 's32[1]{0}', space=sflag, size = 0x4, scoped, tag = 'scoped memory for tpu_custom_call.1']
    #allocation9 [shape = 'u8[262144]{0}', space=vmem, size = 0x40000, scoped, tag = 'input window, operand 2, single buffered']
    #allocation10 [shape = 'u8[786432]{0}', space=vmem, size = 0xc0000, scoped, tag = 'input window, operand 4, single buffered']
    #allocation11 [shape = 's32[1]{0}', space=sflag, size = 0x4, scoped, tag = 'scoped memory for tpu_custom_call.1']
    #allocation12 [shape = 'u8[1024]{0}', space=vmem, size = 0x400, scoped, tag = 'input window, operand 6, single buffered']
    #allocation13 [shape = 'u8[512]{0}', space=vmem, size = 0x400, scoped, tag = 'output window, operand 0, single buffered']
    %19 = vsyncpa [#allocation5], 0
    %20 = vsyncpa [#allocation8], 0
    %21 = vsyncpa [#allocation11], 0
    %22 = vsyncpa [#allocation6], 0
    // Predicated region
    $region2: #{tpu_custom_call.1} parent=1 // pred_check
      _
    $region3: #{tpu_custom_call.1} parent=1 // pred_check_branch
      %24 = sbr.rel (0) target = $region5
    $region4: #{tpu_custom_call.1} parent=1 // pred_region
      %26 = vsyncadd [#allocation5], 0
      %s28 = sshll.u32 %s0, 4
      %s29 = int_to_ptr.hbm [resolvable:$true] %s28
      %s30 = sshll.u32 [#allocation4], 4
      %s31 = int_to_ptr.vmem [resolvable:$true] %s30
      %33 = dma.hbm_to_vmem [thread:$0]  %s29, 256, %s31, [#allocation5]
    $region5: #{tpu_custom_call.1} parent=1 // pred_fallthru
      _
    // Predicated region
    $region6: #{tpu_custom_call.1} parent=1 // pred_check
      _
    $region7: #{tpu_custom_call.1} parent=1 // pred_check_branch
      %35 = sbr.rel (0) target = $region9
    $region8: #{tpu_custom_call.1} parent=1 // pred_region
      %37 = vsyncadd [#allocation8], 0
      %s38 = sshll.u32 %s1, 4
      %s39 = int_to_ptr.hbm [resolvable:$true] %s38
      %s40 = sshll.u32 [#allocation7], 4
      %s41 = int_to_ptr.vmem [resolvable:$true] %s40
      %46 = dma.hbm_to_vmem [thread:$0]  %s39, 16384, %s41, [#allocation8], 512, 512, 32
    $region9: #{tpu_custom_call.1} parent=1 // pred_fallthru
      _
    // Predicated region
    $region10: #{tpu_custom_call.1} parent=1 // pred_check
      _
    $region11: #{tpu_custom_call.1} parent=1 // pred_check_branch
      %48 = sbr.rel (0) target = $region13
    $region12: #{tpu_custom_call.1} parent=1 // pred_region
      %50 = vsyncadd [#allocation8], 0
      %s51 = sshll.u32 %s2, 4
      %s52 = int_to_ptr.hbm [resolvable:$true] %s51
      %s53 = sshll.u32 [#allocation9], 4
      %s54 = int_to_ptr.vmem [resolvable:$true] %s53
      %59 = dma.hbm_to_vmem [thread:$0]  %s52, 8192, %s54, [#allocation8], 256, 256, 16
    $region13: #{tpu_custom_call.1} parent=1 // pred_fallthru
      _
    // Predicated region
    $region14: #{tpu_custom_call.1} parent=1 // pred_check
      _
    $region15: #{tpu_custom_call.1} parent=1 // pred_check_branch
      %61 = sbr.rel (0) target = $region17
    $region16: #{tpu_custom_call.1} parent=1 // pred_region
      _
    $region17: #{tpu_custom_call.1} parent=1 // pred_fallthru
      _
    // Predicated region
    $region18: #{tpu_custom_call.1} parent=1 // pred_check
      _
    $region19: #{tpu_custom_call.1} parent=1 // pred_check_branch
      %63 = sbr.rel (0) target = $region21
    $region20: #{tpu_custom_call.1} parent=1 // pred_region
      %65 = vsyncadd [#allocation11], 0
      %s66 = sshll.u32 %s4, 4
      %s67 = int_to_ptr.hbm [resolvable:$true] %s66
      %s68 = sshll.u32 [#allocation10], 4
      %s69 = int_to_ptr.vmem [resolvable:$true] %s68
      %74 = dma.hbm_to_vmem [thread:$0]  %s67, 24576, %s69, [#allocation11], 768, 768, 48
    $region21: #{tpu_custom_call.1} parent=1 // pred_fallthru
      _
    // Predicated region
    $region22: #{tpu_custom_call.1} parent=1 // pred_check
      _
    $region23: #{tpu_custom_call.1} parent=1 // pred_check_branch
      %76 = sbr.rel (0) target = $region25
    $region24: #{tpu_custom_call.1} parent=1 // pred_region
      _
    $region25: #{tpu_custom_call.1} parent=1 // pred_fallthru
      _
    // Predicated region
    $region26: #{tpu_custom_call.1} parent=1 // pred_check
      _
    $region27: #{tpu_custom_call.1} parent=1 // pred_check_branch
      %78 = sbr.rel (0) target = $region29
    $region28: #{tpu_custom_call.1} parent=1 // pred_region
      %80 = vsyncadd [#allocation11], 0
      %s82 = sshll.u32 %s6, 4
      %s83 = int_to_ptr.hbm [resolvable:$true] %s82
      %s84 = sshll.u32 [#allocation12], 4
      %s85 = int_to_ptr.vmem [resolvable:$true] %s84
      %87 = dma.hbm_to_vmem [thread:$0]  %s83, 32, %s85, [#allocation11]
    $region29: #{tpu_custom_call.1} parent=1 // pred_fallthru
      _
    // Predicated region
    $region30: #{tpu_custom_call.1} parent=1 // pred_check
      _
    $region31: #{tpu_custom_call.1} parent=1 // pred_check_branch
      %89 = sbr.rel (0) target = $region33
    $region32: #{tpu_custom_call.1} parent=1 // pred_region
      _
    $region33: #{tpu_custom_call.1} parent=1 // pred_fallthru
      _
    // Predicated region
    $region34: #{tpu_custom_call.1} parent=1 // pred_check
      _
    $region35: #{tpu_custom_call.1} parent=1 // pred_check_branch
      %91 = sbr.rel (0) target = $region37
    $region36: #{tpu_custom_call.1} parent=1 // pred_region
      _
    $region37: #{tpu_custom_call.1} parent=1 // pred_fallthru
      _
    // Predicated region
    $region38: #{tpu_custom_call.1} parent=1 // pred_check
      _
    $region39: #{tpu_custom_call.1} parent=1 // pred_check_branch
      %93 = sbr.rel (0) target = $region41
    $region40: #{tpu_custom_call.1} parent=1 // pred_region
      _
    $region41: #{tpu_custom_call.1} parent=1 // pred_fallthru
      _
    // Predicated region
    $region42: #{tpu_custom_call.1} parent=1 // pred_check
      _
    $region43: #{tpu_custom_call.1} parent=1 // pred_check_branch
      %95 = sbr.rel (0) target = $region45
    $region44: #{tpu_custom_call.1} parent=1 // pred_region
      %97 = dma.done [#allocation5], 256
    $region45: #{tpu_custom_call.1} parent=1 // pred_fallthru
      _
    // Predicated region
    $region46: #{tpu_custom_call.1} parent=1 // pred_check
      _
    $region47: #{tpu_custom_call.1} parent=1 // pred_check_branch
      %99 = sbr.rel (0) target = $region49
    $region48: #{tpu_custom_call.1} parent=1 // pred_region
      %101 = dma.done [#allocation8], 16384
    $region49: #{tpu_custom_call.1} parent=1 // pred_fallthru
      _
    // Predicated region
    $region50: #{tpu_custom_call.1} parent=1 // pred_check
      _
    $region51: #{tpu_custom_call.1} parent=1 // pred_check_branch
      %103 = sbr.rel (0) target = $region53
    $region52: #{tpu_custom_call.1} parent=1 // pred_region
      %105 = dma.done [#allocation8], 8192
    $region53: #{tpu_custom_call.1} parent=1 // pred_fallthru
      _
    // Predicated region
    $region54: #{tpu_custom_call.1} parent=1 // pred_check
      _
    $region55: #{tpu_custom_call.1} parent=1 // pred_check_branch
      %107 = sbr.rel (0) target = $region57
    $region56: #{tpu_custom_call.1} parent=1 // pred_region
      %109 = dma.done [#allocation11], 24576
    $region57: #{tpu_custom_call.1} parent=1 // pred_fallthru
      _
    // Predicated region
    $region58: #{tpu_custom_call.1} parent=1 // pred_check
      _
    $region59: #{tpu_custom_call.1} parent=1 // pred_check_branch
      %111 = sbr.rel (0) target = $region61
    $region60: #{tpu_custom_call.1} parent=1 // pred_region
      %113 = dma.done [#allocation11], 32
    $region61: #{tpu_custom_call.1} parent=1 // pred_fallthru
      _
    %v114 = vld [vmem:[#allocation4] sm:$0xff]
    %v115 = vld [vmem:[#allocation4 + $0x8] sm:$0xff]
    %v116 = vld [vmem:[#allocation7] sm:$0xff]
    %v117 = vld [vmem:[#allocation7 + $0x8] sm:$0xff]
    %v118 = vld [vmem:[#allocation7 + $0x10] sm:$0xff]
    %v119 = vld [vmem:[#allocation7 + $0x18] sm:$0xff]
    %v120 = vld [vmem:[#allocation7 + $0x20] sm:$0xff]
    %v121 = vld [vmem:[#allocation7 + $0x28] sm:$0xff]
    %v122 = vld [vmem:[#allocation7 + $0x30] sm:$0xff]
    %v123 = vld [vmem:[#allocation7 + $0x38] sm:$0xff]
    %v124 = vld [vmem:[#allocation7 + $0x40] sm:$0xff]
    %v125 = vld [vmem:[#allocation7 + $0x48] sm:$0xff]
    %v126 = vld [vmem:[#allocation7 + $0x50] sm:$0xff]
    %v127 = vld [vmem:[#allocation7 + $0x58] sm:$0xff]
    %v128 = vld [vmem:[#allocation7 + $0x60] sm:$0xff]
    %v129 = vld [vmem:[#allocation7 + $0x68] sm:$0xff]
    %v130 = vld [vmem:[#allocation7 + $0x70] sm:$0xff]
    %v131 = vld [vmem:[#allocation7 + $0x78] sm:$0xff]
    %v132 = vld [vmem:[#allocation7 + $0x80] sm:$0xff]
    %v133 = vld [vmem:[#allocation7 + $0x88] sm:$0xff]
    %v134 = vld [vmem:[#allocation7 + $0x90] sm:$0xff]
    %v135 = vld [vmem:[#allocation7 + $0x98] sm:$0xff]
    %v136 = vld [vmem:[#allocation7 + $0xa0] sm:$0xff]
    %v137 = vld [vmem:[#allocation7 + $0xa8] sm:$0xff]
    %v138 = vld [vmem:[#allocation7 + $0xb0] sm:$0xff]
    %v139 = vld [vmem:[#allocation7 + $0xb8] sm:$0xff]
    %v140 = vld [vmem:[#allocation7 + $0xc0] sm:$0xff]
    %v141 = vld [vmem:[#allocation7 + $0xc8] sm:$0xff]
    %v142 = vld [vmem:[#allocation7 + $0xd0] sm:$0xff]
    %v143 = vld [vmem:[#allocation7 + $0xd8] sm:$0xff]
    %v144 = vld [vmem:[#allocation7 + $0xe0] sm:$0xff]
    %v145 = vld [vmem:[#allocation7 + $0xe8] sm:$0xff]
    %v146 = vld [vmem:[#allocation7 + $0xf0] sm:$0xff]
    %v147 = vld [vmem:[#allocation7 + $0xf8] sm:$0xff]
    %v148 = vld [vmem:[#allocation7 + $0x100] sm:$0xff]
    %v149 = vld [vmem:[#allocation7 + $0x108] sm:$0xff]
    %v150 = vld [vmem:[#allocation7 + $0x110] sm:$0xff]
    %v151 = vld [vmem:[#allocation7 + $0x118] sm:$0xff]
    %v152 = vld [vmem:[#allocation7 + $0x120] sm:$0xff]
    %v153 = vld [vmem:[#allocation7 + $0x128] sm:$0xff]
    %v154 = vld [vmem:[#allocation7 + $0x130] sm:$0xff]
    %v155 = vld [vmem:[#allocation7 + $0x138] sm:$0xff]
    %v156 = vld [vmem:[#allocation7 + $0x140] sm:$0xff]
    %v157 = vld [vmem:[#allocation7 + $0x148] sm:$0xff]
    %v158 = vld [vmem:[#allocation7 + $0x150] sm:$0xff]
    %v159 = vld [vmem:[#allocation7 + $0x158] sm:$0xff]
    %v160 = vld [vmem:[#allocation7 + $0x160] sm:$0xff]
    %v161 = vld [vmem:[#allocation7 + $0x168] sm:$0xff]
    %v162 = vld [vmem:[#allocation7 + $0x170] sm:$0xff]
    %v163 = vld [vmem:[#allocation7 + $0x178] sm:$0xff]
    %v164 = vld [vmem:[#allocation7 + $0x180] sm:$0xff]
    %v165 = vld [vmem:[#allocation7 + $0x188] sm:$0xff]
    %v166 = vld [vmem:[#allocation7 + $0x190] sm:$0xff]
    %v167 = vld [vmem:[#allocation7 + $0x198] sm:$0xff]
    %v168 = vld [vmem:[#allocation7 + $0x1a0] sm:$0xff]
    %v169 = vld [vmem:[#allocation7 + $0x1a8] sm:$0xff]
    %v170 = vld [vmem:[#allocation7 + $0x1b0] sm:$0xff]
    %v171 = vld [vmem:[#allocation7 + $0x1b8] sm:$0xff]
    %v172 = vld [vmem:[#allocation7 + $0x1c0] sm:$0xff]
    %v173 = vld [vmem:[#allocation7 + $0x1c8] sm:$0xff]
    %v174 = vld [vmem:[#allocation7 + $0x1d0] sm:$0xff]
    %v175 = vld [vmem:[#allocation7 + $0x1d8] sm:$0xff]
    %v176 = vld [vmem:[#allocation7 + $0x1e0] sm:$0xff]
    %v177 = vld [vmem:[#allocation7 + $0x1e8] sm:$0xff]
    %v178 = vld [vmem:[#allocation7 + $0x1f0] sm:$0xff]
    %v179 = vld [vmem:[#allocation7 + $0x1f8] sm:$0xff]
    %v180 = vld [vmem:[#allocation7 + $0x200] sm:$0xff]
    %v181 = vld [vmem:[#allocation7 + $0x208] sm:$0xff]
    %v182 = vld [vmem:[#allocation7 + $0x210] sm:$0xff]
    %v183 = vld [vmem:[#allocation7 + $0x218] sm:$0xff]
    %v184 = vld [vmem:[#allocation7 + $0x220] sm:$0xff]
    %v185 = vld [vmem:[#allocation7 + $0x228] sm:$0xff]
    %v186 = vld [vmem:[#allocation7 + $0x230] sm:$0xff]
    %v187 = vld [vmem:[#allocation7 + $0x238] sm:$0xff]
    %v188 = vld [vmem:[#allocation7 + $0x240] sm:$0xff]
    %v189 = vld [vmem:[#allocation7 + $0x248] sm:$0xff]
    %v190 = vld [vmem:[#allocation7 + $0x250] sm:$0xff]
    %v191 = vld [vmem:[#allocation7 + $0x258] sm:$0xff]
    %v192 = vld [vmem:[#allocation7 + $0x260] sm:$0xff]
    %v193 = vld [vmem:[#allocation7 + $0x268] sm:$0xff]
    %v194 = vld [vmem:[#allocation7 + $0x270] sm:$0xff]
    %v195 = vld [vmem:[#allocation7 + $0x278] sm:$0xff]
    %v196 = vld [vmem:[#allocation7 + $0x280] sm:$0xff]
    %v197 = vld [vmem:[#allocation7 + $0x288] sm:$0xff]
    %v198 = vld [vmem:[#allocation7 + $0x290] sm:$0xff]
    %v199 = vld [vmem:[#allocation7 + $0x298] sm:$0xff]
    %v200 = vld [vmem:[#allocation7 + $0x2a0] sm:$0xff]
    %v201 = vld [vmem:[#allocation7 + $0x2a8] sm:$0xff]
    %v202 = vld [vmem:[#allocation7 + $0x2b0] sm:$0xff]
    %v203 = vld [vmem:[#allocation7 + $0x2b8] sm:$0xff]
    %v204 = vld [vmem:[#allocation7 + $0x2c0] sm:$0xff]
    %v205 = vld [vmem:[#allocation7 + $0x2c8] sm:$0xff]
    %v206 = vld [vmem:[#allocation7 + $0x2d0] sm:$0xff]
    %v207 = vld [vmem:[#allocation7 + $0x2d8] sm:$0xff]
    %v208 = vld [vmem:[#allocation7 + $0x2e0] sm:$0xff]
    %v209 = vld [vmem:[#allocation7 + $0x2e8] sm:$0xff]
    %v210 = vld [vmem:[#allocation7 + $0x2f0] sm:$0xff]
    %v211 = vld [vmem:[#allocation7 + $0x2f8] sm:$0xff]
    %v212 = vld [vmem:[#allocation7 + $0x300] sm:$0xff]
    %v213 = vld [vmem:[#allocation7 + $0x308] sm:$0xff]
    %v214 = vld [vmem:[#allocation7 + $0x310] sm:$0xff]
    %v215 = vld [vmem:[#allocation7 + $0x318] sm:$0xff]
    %v216 = vld [vmem:[#allocation7 + $0x320] sm:$0xff]
    %v217 = vld [vmem:[#allocation7 + $0x328] sm:$0xff]
    %v218 = vld [vmem:[#allocation7 + $0x330] sm:$0xff]
    %v219 = vld [vmem:[#allocation7 + $0x338] sm:$0xff]
    %v220 = vld [vmem:[#allocation7 + $0x340] sm:$0xff]
    %v221 = vld [vmem:[#allocation7 + $0x348] sm:$0xff]
    %v222 = vld [vmem:[#allocation7 + $0x350] sm:$0xff]
    %v223 = vld [vmem:[#allocation7 + $0x358] sm:$0xff]
    %v224 = vld [vmem:[#allocation7 + $0x360] sm:$0xff]
    %v225 = vld [vmem:[#allocation7 + $0x368] sm:$0xff]
    %v226 = vld [vmem:[#allocation7 + $0x370] sm:$0xff]
    %v227 = vld [vmem:[#allocation7 + $0x378] sm:$0xff]
    %v228 = vld [vmem:[#allocation7 + $0x380] sm:$0xff]
    %v229 = vld [vmem:[#allocation7 + $0x388] sm:$0xff]
    %v230 = vld [vmem:[#allocation7 + $0x390] sm:$0xff]
    %v231 = vld [vmem:[#allocation7 + $0x398] sm:$0xff]
    %v232 = vld [vmem:[#allocation7 + $0x3a0] sm:$0xff]
    %v233 = vld [vmem:[#allocation7 + $0x3a8] sm:$0xff]
    %v234 = vld [vmem:[#allocation7 + $0x3b0] sm:$0xff]
    %v235 = vld [vmem:[#allocation7 + $0x3b8] sm:$0xff]
    %v236 = vld [vmem:[#allocation7 + $0x3c0] sm:$0xff]
    %v237 = vld [vmem:[#allocation7 + $0x3c8] sm:$0xff]
    %v238 = vld [vmem:[#allocation7 + $0x3d0] sm:$0xff]
    %v239 = vld [vmem:[#allocation7 + $0x3d8] sm:$0xff]
    %v240 = vld [vmem:[#allocation7 + $0x3e0] sm:$0xff]
    %v241 = vld [vmem:[#allocation7 + $0x3e8] sm:$0xff]
    %v242 = vld [vmem:[#allocation7 + $0x3f0] sm:$0xff]
    %v243 = vld [vmem:[#allocation7 + $0x3f8] sm:$0xff]
    %244 = vmatpush.msra.mxu0 %v176
    %245 = vmatpush.msra.mxu0 %v172
    %246 = vmatpush.msra.mxu0 %v168
    %247 = vmatpush.msra.mxu0 %v164
    %248 = vmatpush.msra.mxu0 %v160
    %249 = vmatpush.msra.mxu0 %v156
    %250 = vmatpush.msra.mxu0 %v152
    %251 = vmatpush.msra.mxu0 %v148
    %252 = vmatpush.msra.mxu0 %v144
    %253 = vmatpush.msra.mxu0 %v140
    %254 = vmatpush.msra.mxu0 %v136
    %255 = vmatpush.msra.mxu0 %v132
    %256 = vmatpush.msra.mxu0 %v128
    %257 = vmatpush.msra.mxu0 %v124
    %258 = vmatpush.msra.mxu0 %v120
    %259 = vmatpush.msra.mxu0 %v116
    %260 = vmatmul.f32.gmra.mxu0 %v114
    %v261 = vpop.f32.mrf.mxu0
    %v262 = vadd.f32 0.0, %v261
    %263 = vdwg.mxu0
    %264 = vmatpush.msra.mxu0 %v240
    %265 = vmatpush.msra.mxu0 %v236
    %266 = vmatpush.msra.mxu0 %v232
    %267 = vmatpush.msra.mxu0 %v228
    %268 = vmatpush.msra.mxu0 %v224
    %269 = vmatpush.msra.mxu0 %v220
    %270 = vmatpush.msra.mxu0 %v216
    %271 = vmatpush.msra.mxu0 %v212
    %272 = vmatpush.msra.mxu0 %v208
    %273 = vmatpush.msra.mxu0 %v204
    %274 = vmatpush.msra.mxu0 %v200
    %275 = vmatpush.msra.mxu0 %v196
    %276 = vmatpush.msra.mxu0 %v192
    %277 = vmatpush.msra.mxu0 %v188
    %278 = vmatpush.msra.mxu0 %v184
    %279 = vmatpush.msra.mxu0 %v180
    %280 = vmatmul.f32.gmra.mxu0 %v115
    %v281 = vpop.f32.mrf.mxu0
    %v282 = vadd.f32 %v262, %v281
    %283 = vdwg.mxu0
    %284 = vmatpush.msra.mxu0 %v177
    %285 = vmatpush.msra.mxu0 %v173
    %286 = vmatpush.msra.mxu0 %v169
    %287 = vmatpush.msra.mxu0 %v165
    %288 = vmatpush.msra.mxu0 %v161
    %289 = vmatpush.msra.mxu0 %v157
    %290 = vmatpush.msra.mxu0 %v153
    %291 = vmatpush.msra.mxu0 %v149
    %292 = vmatpush.msra.mxu0 %v145
    %293 = vmatpush.msra.mxu0 %v141
    %294 = vmatpush.msra.mxu0 %v137
    %295 = vmatpush.msra.mxu0 %v133
    %296 = vmatpush.msra.mxu0 %v129
    %297 = vmatpush.msra.mxu0 %v125
    %298 = vmatpush.msra.mxu0 %v121
    %299 = vmatpush.msra.mxu0 %v117
    %300 = vmatmul.f32.gmra.mxu0 %v114
    %v301 = vpop.f32.mrf.mxu0
    %v302 = vadd.f32 0.0, %v301
    %303 = vdwg.mxu0
    %304 = vmatpush.msra.mxu0 %v241
    %305 = vmatpush.msra.mxu0 %v237
    %306 = vmatpush.msra.mxu0 %v233
    %307 = vmatpush.msra.mxu0 %v229
    %308 = vmatpush.msra.mxu0 %v225
    %309 = vmatpush.msra.mxu0 %v221
    %310 = vmatpush.msra.mxu0 %v217
    %311 = vmatpush.msra.mxu0 %v213
    %312 = vmatpush.msra.mxu0 %v209
    %313 = vmatpush.msra.mxu0 %v205
    %314 = vmatpush.msra.mxu0 %v201
    %315 = vmatpush.msra.mxu0 %v197
    %316 = vmatpush.msra.mxu0 %v193
    %317 = vmatpush.msra.mxu0 %v189
    %318 = vmatpush.msra.mxu0 %v185
    %319 = vmatpush.msra.mxu0 %v181
    %320 = vmatmul.f32.gmra.mxu0 %v115
    %v321 = vpop.f32.mrf.mxu0
    %v322 = vadd.f32 %v302, %v321
    %323 = vdwg.mxu0
    %324 = vmatpush.msra.mxu0 %v178
    %325 = vmatpush.msra.mxu0 %v174
    %326 = vmatpush.msra.mxu0 %v170
    %327 = vmatpush.msra.mxu0 %v166
    %328 = vmatpush.msra.mxu0 %v162
    %329 = vmatpush.msra.mxu0 %v158
    %330 = vmatpush.msra.mxu0 %v154
    %331 = vmatpush.msra.mxu0 %v150
    %332 = vmatpush.msra.mxu0 %v146
    %333 = vmatpush.msra.mxu0 %v142
    %334 = vmatpush.msra.mxu0 %v138
    %335 = vmatpush.msra.mxu0 %v134
    %336 = vmatpush.msra.mxu0 %v130
    %337 = vmatpush.msra.mxu0 %v126
    %338 = vmatpush.msra.mxu0 %v122
    %339 = vmatpush.msra.mxu0 %v118
    %340 = vmatmul.f32.gmra.mxu0 %v114
    %v341 = vpop.f32.mrf.mxu0
    %v342 = vadd.f32 0.0, %v341
    %343 = vdwg.mxu0
    %344 = vmatpush.msra.mxu0 %v242
    %345 = vmatpush.msra.mxu0 %v238
    %346 = vmatpush.msra.mxu0 %v234
    %347 = vmatpush.msra.mxu0 %v230
    %348 = vmatpush.msra.mxu0 %v226
    %349 = vmatpush.msra.mxu0 %v222
    %350 = vmatpush.msra.mxu0 %v218
    %351 = vmatpush.msra.mxu0 %v214
    %352 = vmatpush.msra.mxu0 %v210
    %353 = vmatpush.msra.mxu0 %v206
    %354 = vmatpush.msra.mxu0 %v202
    %355 = vmatpush.msra.mxu0 %v198
    %356 = vmatpush.msra.mxu0 %v194
    %357 = vmatpush.msra.mxu0 %v190
    %358 = vmatpush.msra.mxu0 %v186
    %359 = vmatpush.msra.mxu0 %v182
    %360 = vmatmul.f32.gmra.mxu0 %v115
    %v361 = vpop.f32.mrf.mxu0
    %v362 = vadd.f32 %v342, %v361
    %363 = vdwg.mxu0
    %364 = vmatpush.msra.mxu0 %v179
    %365 = vmatpush.msra.mxu0 %v175
    %366 = vmatpush.msra.mxu0 %v171
    %367 = vmatpush.msra.mxu0 %v167
    %368 = vmatpush.msra.mxu0 %v163
    %369 = vmatpush.msra.mxu0 %v159
    %370 = vmatpush.msra.mxu0 %v155
    %371 = vmatpush.msra.mxu0 %v151
    %372 = vmatpush.msra.mxu0 %v147
    %373 = vmatpush.msra.mxu0 %v143
    %374 = vmatpush.msra.mxu0 %v139
    %375 = vmatpush.msra.mxu0 %v135
    %376 = vmatpush.msra.mxu0 %v131
    %377 = vmatpush.msra.mxu0 %v127
    %378 = vmatpush.msra.mxu0 %v123
    %379 = vmatpush.msra.mxu0 %v119
    %380 = vmatmul.f32.gmra.mxu0 %v114
    %v381 = vpop.f32.mrf.mxu0
    %v382 = vadd.f32 0.0, %v381
    %383 = vdwg.mxu0
    %384 = vmatpush.msra.mxu0 %v243
    %385 = vmatpush.msra.mxu0 %v239
    %386 = vmatpush.msra.mxu0 %v235
    %387 = vmatpush.msra.mxu0 %v231
    %388 = vmatpush.msra.mxu0 %v227
    %389 = vmatpush.msra.mxu0 %v223
    %390 = vmatpush.msra.mxu0 %v219
    %391 = vmatpush.msra.mxu0 %v215
    %392 = vmatpush.msra.mxu0 %v211
    %393 = vmatpush.msra.mxu0 %v207
    %394 = vmatpush.msra.mxu0 %v203
    %395 = vmatpush.msra.mxu0 %v199
    %396 = vmatpush.msra.mxu0 %v195
    %397 = vmatpush.msra.mxu0 %v191
    %398 = vmatpush.msra.mxu0 %v187
    %399 = vmatpush.msra.mxu0 %v183
    %400 = vmatmul.f32.gmra.mxu0 %v115
    %v401 = vpop.f32.mrf.mxu0
    %v402 = vadd.f32 %v382, %v401
    %403 = vdwg.mxu0
    %v404 = vld [vmem:[%s3] sm:$0x3]
    %v406 = vperm.slane %v404, 0
    %v407 = vperm.slane %v404, 1
    %v410 = vadd.f32 %v282, %v406
    %v411 = vadd.f32 %v322, %v407
    %v414 = vrot.slane %v115, 7
    %vm415 = vcmask 1040384
    %v416 = vsel %vm415, %v114, %v414
    %vm417 = vcmask 1041409
    %v418 = vsel %vm417, %v114, %v414
    %v419 = vrot.slane %v418, 1
    %vm420 = vcmask 1042434
    %v421 = vsel %vm420, %v114, %v414
    %v422 = vrot.slane %v421, 2
    %vm423 = vcmask 1043459
    %v424 = vsel %vm423, %v114, %v414
    %v425 = vrot.slane %v424, 3
    %vm426 = vcmask 1044484
    %v427 = vsel %vm426, %v114, %v414
    %v428 = vrot.slane %v427, 4
    %vm429 = vcmask 1045509
    %v430 = vsel %vm429, %v114, %v414
    %v431 = vrot.slane %v430, 5
    %vm432 = vcmask 1046534
    %v433 = vsel %vm432, %v114, %v414
    %v434 = vrot.slane %v433, 6
    %vm435 = vcmask 1046528
    %v436 = vsel %vm435, %v414, %v114
    %v437 = vrot.slane %v436, 7
    %v438 = vperm.slane %v416, 0
    %v439 = vperm.slane %v416, 1
    %v440 = vperm.slane %v419, 0
    %v441 = vperm.slane %v419, 1
    %v442 = vperm.slane %v422, 0
    %v443 = vperm.slane %v422, 1
    %v444 = vperm.slane %v425, 0
    %v445 = vperm.slane %v425, 1
    %v446 = vperm.slane %v428, 0
    %v447 = vperm.slane %v428, 1
    %v448 = vperm.slane %v431, 0
    %v449 = vperm.slane %v431, 1
    %v450 = vperm.slane %v434, 0
    %v451 = vperm.slane %v434, 1
    %v452 = vperm.slane %v437, 0
    %v453 = vperm.slane %v437, 1
    %v470 = vsub.f32 %v438, %v114
    %v471 = vsub.f32 %v439, %v115
    %v472 = vsub.f32 %v440, %v114
    %v473 = vsub.f32 %v441, %v115
    %v474 = vsub.f32 %v442, %v114
    %v475 = vsub.f32 %v443, %v115
    %v476 = vsub.f32 %v444, %v114
    %v477 = vsub.f32 %v445, %v115
    %v478 = vsub.f32 %v446, %v114
    %v479 = vsub.f32 %v447, %v115
    %v480 = vsub.f32 %v448, %v114
    %v481 = vsub.f32 %v449, %v115
    %v482 = vsub.f32 %v450, %v114
    %v483 = vsub.f32 %v451, %v115
    %v484 = vsub.f32 %v452, %v114
    %v485 = vsub.f32 %v453, %v115
    %v486 = vand.u32 2147483647, %v470
    %v487 = vand.u32 2147483647, %v471
    %v488 = vand.u32 2147483647, %v472
    %v489 = vand.u32 2147483647, %v473
    %v490 = vand.u32 2147483647, %v474
    %v491 = vand.u32 2147483647, %v475
    %v492 = vand.u32 2147483647, %v476
    %v493 = vand.u32 2147483647, %v477
    %v494 = vand.u32 2147483647, %v478
    %v495 = vand.u32 2147483647, %v479
    %v496 = vand.u32 2147483647, %v480
    %v497 = vand.u32 2147483647, %v481
    %v498 = vand.u32 2147483647, %v482
    %v499 = vand.u32 2147483647, %v483
    %v500 = vand.u32 2147483647, %v484
    %v501 = vand.u32 2147483647, %v485
    %v502 = vld [vmem:[#allocation9] sm:$0xff]
    %v503 = vld [vmem:[#allocation9 + $0x8] sm:$0xff]
    %v504 = vld [vmem:[#allocation9 + $0x10] sm:$0xff]
    %v505 = vld [vmem:[#allocation9 + $0x18] sm:$0xff]
    %v506 = vld [vmem:[#allocation9 + $0x20] sm:$0xff]
    %v507 = vld [vmem:[#allocation9 + $0x28] sm:$0xff]
    %v508 = vld [vmem:[#allocation9 + $0x30] sm:$0xff]
    %v509 = vld [vmem:[#allocation9 + $0x38] sm:$0xff]
    %v510 = vld [vmem:[#allocation9 + $0x40] sm:$0xff]
    %v511 = vld [vmem:[#allocation9 + $0x48] sm:$0xff]
    %v512 = vld [vmem:[#allocation9 + $0x50] sm:$0xff]
    %v513 = vld [vmem:[#allocation9 + $0x58] sm:$0xff]
    %v514 = vld [vmem:[#allocation9 + $0x60] sm:$0xff]
    %v515 = vld [vmem:[#allocation9 + $0x68] sm:$0xff]
    %v516 = vld [vmem:[#allocation9 + $0x70] sm:$0xff]
    %v517 = vld [vmem:[#allocation9 + $0x78] sm:$0xff]
    %v518 = vld [vmem:[#allocation9 + $0x80] sm:$0xff]
    %v519 = vld [vmem:[#allocation9 + $0x88] sm:$0xff]
    %v520 = vld [vmem:[#allocation9 + $0x90] sm:$0xff]
    %v521 = vld [vmem:[#allocation9 + $0x98] sm:$0xff]
    %v522 = vld [vmem:[#allocation9 + $0xa0] sm:$0xff]
    %v523 = vld [vmem:[#allocation9 + $0xa8] sm:$0xff]
    %v524 = vld [vmem:[#allocation9 + $0xb0] sm:$0xff]
    %v525 = vld [vmem:[#allocation9 + $0xb8] sm:$0xff]
    %v526 = vld [vmem:[#allocation9 + $0xc0] sm:$0xff]
    %v527 = vld [vmem:[#allocation9 + $0xc8] sm:$0xff]
    %v528 = vld [vmem:[#allocation9 + $0xd0] sm:$0xff]
    %v529 = vld [vmem:[#allocation9 + $0xd8] sm:$0xff]
    %v530 = vld [vmem:[#allocation9 + $0xe0] sm:$0xff]
    %v531 = vld [vmem:[#allocation9 + $0xe8] sm:$0xff]
    %v532 = vld [vmem:[#allocation9 + $0xf0] sm:$0xff]
    %v533 = vld [vmem:[#allocation9 + $0xf8] sm:$0xff]
    %v534 = vld [vmem:[#allocation9 + $0x100] sm:$0xff]
    %v535 = vld [vmem:[#allocation9 + $0x108] sm:$0xff]
    %v536 = vld [vmem:[#allocation9 + $0x110] sm:$0xff]
    %v537 = vld [vmem:[#allocation9 + $0x118] sm:$0xff]
    %v538 = vld [vmem:[#allocation9 + $0x120] sm:$0xff]
    %v539 = vld [vmem:[#allocation9 + $0x128] sm:$0xff]
    %v540 = vld [vmem:[#allocation9 + $0x130] sm:$0xff]
    %v541 = vld [vmem:[#allocation9 + $0x138] sm:$0xff]
    %v542 = vld [vmem:[#allocation9 + $0x140] sm:$0xff]
    %v543 = vld [vmem:[#allocation9 + $0x148] sm:$0xff]
    %v544 = vld [vmem:[#allocation9 + $0x150] sm:$0xff]
    %v545 = vld [vmem:[#allocation9 + $0x158] sm:$0xff]
    %v546 = vld [vmem:[#allocation9 + $0x160] sm:$0xff]
    %v547 = vld [vmem:[#allocation9 + $0x168] sm:$0xff]
    %v548 = vld [vmem:[#allocation9 + $0x170] sm:$0xff]
    %v549 = vld [vmem:[#allocation9 + $0x178] sm:$0xff]
    %v550 = vld [vmem:[#allocation9 + $0x180] sm:$0xff]
    %v551 = vld [vmem:[#allocation9 + $0x188] sm:$0xff]
    %v552 = vld [vmem:[#allocation9 + $0x190] sm:$0xff]
    %v553 = vld [vmem:[#allocation9 + $0x198] sm:$0xff]
    %v554 = vld [vmem:[#allocation9 + $0x1a0] sm:$0xff]
    %v555 = vld [vmem:[#allocation9 + $0x1a8] sm:$0xff]
    %v556 = vld [vmem:[#allocation9 + $0x1b0] sm:$0xff]
    %v557 = vld [vmem:[#allocation9 + $0x1b8] sm:$0xff]
    %v558 = vld [vmem:[#allocation9 + $0x1c0] sm:$0xff]
    %v559 = vld [vmem:[#allocation9 + $0x1c8] sm:$0xff]
    %v560 = vld [vmem:[#allocation9 + $0x1d0] sm:$0xff]
    %v561 = vld [vmem:[#allocation9 + $0x1d8] sm:$0xff]
    %v562 = vld [vmem:[#allocation9 + $0x1e0] sm:$0xff]
    %v563 = vld [vmem:[#allocation9 + $0x1e8] sm:$0xff]
    %v564 = vld [vmem:[#allocation9 + $0x1f0] sm:$0xff]
    %v565 = vld [vmem:[#allocation9 + $0x1f8] sm:$0xff]
    %566 = vmatpush.msra.mxu0 %v532
    %567 = vmatpush.msra.mxu0 %v530
    %568 = vmatpush.msra.mxu0 %v528
    %569 = vmatpush.msra.mxu0 %v526
    %570 = vmatpush.msra.mxu0 %v524
    %571 = vmatpush.msra.mxu0 %v522
    %572 = vmatpush.msra.mxu0 %v520
    %573 = vmatpush.msra.mxu0 %v518
    %574 = vmatpush.msra.mxu0 %v516
    %575 = vmatpush.msra.mxu0 %v514
    %576 = vmatpush.msra.mxu0 %v512
    %577 = vmatpush.msra.mxu0 %v510
    %578 = vmatpush.msra.mxu0 %v508
    %579 = vmatpush.msra.mxu0 %v506
    %580 = vmatpush.msra.mxu0 %v504
    %581 = vmatpush.msra.mxu0 %v502
    %582 = vmatmul.f32.gmra.mxu0 %v486
    %v583 = vpop.f32.mrf.mxu0
    %v584 = vadd.f32 0.0, %v583
    %585 = vmatmul.f32.gmra.mxu0 %v488
    %v586 = vpop.f32.mrf.mxu0
    %v587 = vadd.f32 0.0, %v586
    %588 = vmatmul.f32.gmra.mxu0 %v490
    %v589 = vpop.f32.mrf.mxu0
    %v590 = vadd.f32 0.0, %v589
    %591 = vmatmul.f32.gmra.mxu0 %v492
    %v592 = vpop.f32.mrf.mxu0
    %v593 = vadd.f32 0.0, %v592
    %594 = vmatmul.f32.gmra.mxu0 %v494
    %v595 = vpop.f32.mrf.mxu0
    %v596 = vadd.f32 0.0, %v595
    %597 = vmatmul.f32.gmra.mxu0 %v496
    %v598 = vpop.f32.mrf.mxu0
    %v599 = vadd.f32 0.0, %v598
    %600 = vmatmul.f32.gmra.mxu0 %v498
    %v601 = vpop.f32.mrf.mxu0
    %v602 = vadd.f32 0.0, %v601
    %603 = vmatmul.f32.gmra.mxu0 %v500
    %v604 = vpop.f32.mrf.mxu0
    %v605 = vadd.f32 0.0, %v604
    %606 = vdwg.mxu0
    %607 = vmatpush.msra.mxu0 %v564
    %608 = vmatpush.msra.mxu0 %v562
    %609 = vmatpush.msra.mxu0 %v560
    %610 = vmatpush.msra.mxu0 %v558
    %611 = vmatpush.msra.mxu0 %v556
    %612 = vmatpush.msra.mxu0 %v554
    %613 = vmatpush.msra.mxu0 %v552
    %614 = vmatpush.msra.mxu0 %v550
    %615 = vmatpush.msra.mxu0 %v548
    %616 = vmatpush.msra.mxu0 %v546
    %617 = vmatpush.msra.mxu0 %v544
    %618 = vmatpush.msra.mxu0 %v542
    %619 = vmatpush.msra.mxu0 %v540
    %620 = vmatpush.msra.mxu0 %v538
    %621 = vmatpush.msra.mxu0 %v536
    %622 = vmatpush.msra.mxu0 %v534
    %623 = vmatmul.f32.gmra.mxu0 %v487
    %v624 = vpop.f32.mrf.mxu0
    %v625 = vadd.f32 %v584, %v624
    %626 = vmatmul.f32.gmra.mxu0 %v489
    %v627 = vpop.f32.mrf.mxu0
    %v628 = vadd.f32 %v587, %v627
    %629 = vmatmul.f32.gmra.mxu0 %v491
    %v630 = vpop.f32.mrf.mxu0
    %v631 = vadd.f32 %v590, %v630
    %632 = vmatmul.f32.gmra.mxu0 %v493
    %v633 = vpop.f32.mrf.mxu0
    %v634 = vadd.f32 %v593, %v633
    %635 = vmatmul.f32.gmra.mxu0 %v495
    %v636 = vpop.f32.mrf.mxu0
    %v637 = vadd.f32 %v596, %v636
    %638 = vmatmul.f32.gmra.mxu0 %v497
    %v639 = vpop.f32.mrf.mxu0
    %v640 = vadd.f32 %v599, %v639
    %641 = vmatmul.f32.gmra.mxu0 %v499
    %v642 = vpop.f32.mrf.mxu0
    %v643 = vadd.f32 %v602, %v642
    %644 = vmatmul.f32.gmra.mxu0 %v501
    %v645 = vpop.f32.mrf.mxu0
    %v646 = vadd.f32 %v605, %v645
    %647 = vdwg.mxu0
    %648 = vmatpush.msra.mxu0 %v533
    %649 = vmatpush.msra.mxu0 %v531
    %650 = vmatpush.msra.mxu0 %v529
    %651 = vmatpush.msra.mxu0 %v527
    %652 = vmatpush.msra.mxu0 %v525
    %653 = vmatpush.msra.mxu0 %v523
    %654 = vmatpush.msra.mxu0 %v521
    %655 = vmatpush.msra.mxu0 %v519
    %656 = vmatpush.msra.mxu0 %v517
    %657 = vmatpush.msra.mxu0 %v515
    %658 = vmatpush.msra.mxu0 %v513
    %659 = vmatpush.msra.mxu0 %v511
    %660 = vmatpush.msra.mxu0 %v509
    %661 = vmatpush.msra.mxu0 %v507
    %662 = vmatpush.msra.mxu0 %v505
    %663 = vmatpush.msra.mxu0 %v503
    %664 = vmatmul.f32.gmra.mxu0 %v486
    %v665 = vpop.f32.mrf.mxu0
    %v666 = vadd.f32 0.0, %v665
    %667 = vmatmul.f32.gmra.mxu0 %v488
    %v668 = vpop.f32.mrf.mxu0
    %v669 = vadd.f32 0.0, %v668
    %670 = vmatmul.f32.gmra.mxu0 %v490
    %v671 = vpop.f32.mrf.mxu0
    %v672 = vadd.f32 0.0, %v671
    %673 = vmatmul.f32.gmra.mxu0 %v492
    %v674 = vpop.f32.mrf.mxu0
    %v675 = vadd.f32 0.0, %v674
    %676 = vmatmul.f32.gmra.mxu0 %v494
    %v677 = vpop.f32.mrf.mxu0
    %v678 = vadd.f32 0.0, %v677
    %679 = vmatmul.f32.gmra.mxu0 %v496
    %v680 = vpop.f32.mrf.mxu0
    %v681 = vadd.f32 0.0, %v680
    %682 = vmatmul.f32.gmra.mxu0 %v498
    %v683 = vpop.f32.mrf.mxu0
    %v684 = vadd.f32 0.0, %v683
    %685 = vmatmul.f32.gmra.mxu0 %v500
    %v686 = vpop.f32.mrf.mxu0
    %v687 = vadd.f32 0.0, %v686
    %688 = vdwg.mxu0
    %689 = vmatpush.msra.mxu0 %v565
    %690 = vmatpush.msra.mxu0 %v563
    %691 = vmatpush.msra.mxu0 %v561
    %692 = vmatpush.msra.mxu0 %v559
    %693 = vmatpush.msra.mxu0 %v557
    %694 = vmatpush.msra.mxu0 %v555
    %695 = vmatpush.msra.mxu0 %v553
    %696 = vmatpush.msra.mxu0 %v551
    %697 = vmatpush.msra.mxu0 %v549
    %698 = vmatpush.msra.mxu0 %v547
    %699 = vmatpush.msra.mxu0 %v545
    %700 = vmatpush.msra.mxu0 %v543
    %701 = vmatpush.msra.mxu0 %v541
    %702 = vmatpush.msra.mxu0 %v539
    %703 = vmatpush.msra.mxu0 %v537
    %704 = vmatpush.msra.mxu0 %v535
    %705 = vmatmul.f32.gmra.mxu0 %v487
    %v706 = vpop.f32.mrf.mxu0
    %v707 = vadd.f32 %v666, %v706
    %708 = vmatmul.f32.gmra.mxu0 %v489
    %v709 = vpop.f32.mrf.mxu0
    %v710 = vadd.f32 %v669, %v709
    %711 = vmatmul.f32.gmra.mxu0 %v491
    %v712 = vpop.f32.mrf.mxu0
    %v713 = vadd.f32 %v672, %v712
    %714 = vmatmul.f32.gmra.mxu0 %v493
    %v715 = vpop.f32.mrf.mxu0
    %v716 = vadd.f32 %v675, %v715
    %717 = vmatmul.f32.gmra.mxu0 %v495
    %v718 = vpop.f32.mrf.mxu0
    %v719 = vadd.f32 %v678, %v718
    %720 = vmatmul.f32.gmra.mxu0 %v497
    %v721 = vpop.f32.mrf.mxu0
    %v722 = vadd.f32 %v681, %v721
    %723 = vmatmul.f32.gmra.mxu0 %v499
    %v724 = vpop.f32.mrf.mxu0
    %v725 = vadd.f32 %v684, %v724
    %726 = vmatmul.f32.gmra.mxu0 %v501
    %v727 = vpop.f32.mrf.mxu0
    %v728 = vadd.f32 %v687, %v727
    %729 = vdwg.mxu0
    %v732 = vrot.slane %v411, 7
    %v733 = vsel %vm415, %v410, %v732
    %v734 = vsel %vm417, %v410, %v732
    %v735 = vrot.slane %v734, 1
    %v736 = vsel %vm420, %v410, %v732
    %v737 = vrot.slane %v736, 2
    %v738 = vsel %vm423, %v410, %v732
    %v739 = vrot.slane %v738, 3
    %v740 = vsel %vm426, %v410, %v732
    %v741 = vrot.slane %v740, 4
    %v742 = vsel %vm429, %v410, %v732
    %v743 = vrot.slane %v742, 5
    %v744 = vsel %vm432, %v410, %v732
    %v745 = vrot.slane %v744, 6
    %v746 = vsel %vm435, %v732, %v410
    %v747 = vrot.slane %v746, 7
    %v748 = vperm.slane %v733, 0
    %v749 = vperm.slane %v733, 1
    %v750 = vperm.slane %v735, 0
    %v751 = vperm.slane %v735, 1
    %v752 = vperm.slane %v737, 0
    %v753 = vperm.slane %v737, 1
    %v754 = vperm.slane %v739, 0
    %v755 = vperm.slane %v739, 1
    %v756 = vperm.slane %v741, 0
    %v757 = vperm.slane %v741, 1
    %v758 = vperm.slane %v743, 0
    %v759 = vperm.slane %v743, 1
    %v760 = vperm.slane %v745, 0
    %v761 = vperm.slane %v745, 1
    %v762 = vperm.slane %v747, 0
    %v763 = vperm.slane %v747, 1
    %v780 = vadd.f32 %v748, %v362
    %v781 = vadd.f32 %v749, %v402
    %v782 = vadd.f32 %v750, %v362
    %v783 = vadd.f32 %v751, %v402
    %v784 = vadd.f32 %v752, %v362
    %v785 = vadd.f32 %v753, %v402
    %v786 = vadd.f32 %v754, %v362
    %v787 = vadd.f32 %v755, %v402
    %v788 = vadd.f32 %v756, %v362
    %v789 = vadd.f32 %v757, %v402
    %v790 = vadd.f32 %v758, %v362
    %v791 = vadd.f32 %v759, %v402
    %v792 = vadd.f32 %v760, %v362
    %v793 = vadd.f32 %v761, %v402
    %v794 = vadd.f32 %v762, %v362
    %v795 = vadd.f32 %v763, %v402
    %v796 = vadd.f32 %v780, %v625
    %v797 = vadd.f32 %v781, %v707
    %v798 = vadd.f32 %v782, %v628
    %v799 = vadd.f32 %v783, %v710
    %v800 = vadd.f32 %v784, %v631
    %v801 = vadd.f32 %v785, %v713
    %v802 = vadd.f32 %v786, %v634
    %v803 = vadd.f32 %v787, %v716
    %v804 = vadd.f32 %v788, %v637
    %v805 = vadd.f32 %v789, %v719
    %v806 = vadd.f32 %v790, %v640
    %v807 = vadd.f32 %v791, %v722
    %v808 = vadd.f32 %v792, %v643
    %v809 = vadd.f32 %v793, %v725
    %v810 = vadd.f32 %v794, %v646
    %v811 = vadd.f32 %v795, %v728
    %v812 = vmax.f32 %v796, 0.0
    %v813 = vmax.f32 %v797, 0.0
    %v814 = vmax.f32 %v798, 0.0
    %v815 = vmax.f32 %v799, 0.0
    %v816 = vmax.f32 %v800, 0.0
    %v817 = vmax.f32 %v801, 0.0
    %v818 = vmax.f32 %v802, 0.0
    %v819 = vmax.f32 %v803, 0.0
    %v820 = vmax.f32 %v804, 0.0
    %v821 = vmax.f32 %v805, 0.0
    %v822 = vmax.f32 %v806, 0.0
    %v823 = vmax.f32 %v807, 0.0
    %v824 = vmax.f32 %v808, 0.0
    %v825 = vmax.f32 %v809, 0.0
    %v826 = vmax.f32 %v810, 0.0
    %v827 = vmax.f32 %v811, 0.0
    %v828 = vlaneseq
    %v829 = vshrl.u32 %v828, 7
    %v830 = vlaneseq
    %v831 = vand.u32 %v830, 127
    %vm832 = vcmp.ne.s32.totalorder %v831, %v829
    %vm833 = vcmp.eq.s32.totalorder %v829, 7
    %vm834 = vcmp.eq.s32.totalorder %v831, 6
    %vm835 = vmand %vm833, %vm834
    %vm836 = vmxor %vm835, 1
    %vm837 = vmand %vm832, %vm836
    %v838 = vsel %vm837, 1, 0
    %v839 = vcvt.s32.f32 %v838
    %v840 = vperm.slane %v839, 0
    %v841 = vlaneseq
    %v842 = vshrl.u32 %v841, 7
    %844 = vset.pattern.permute.xlu0 %v842
    %845 = vperm.xlu0 %844, %v840
    %v846 = vpop.permute.xlu0 %845
    %v847 = vperm.slane %v839, 1
    %v848 = vlaneseq
    %v849 = vshrl.u32 %v848, 7
    %851 = vset.pattern.permute.xlu0 %v849
    %852 = vperm.xlu0 %851, %v847
    %v853 = vpop.permute.xlu0 %852
    %v854 = vperm.slane %v839, 2
    %v855 = vlaneseq
    %v856 = vshrl.u32 %v855, 7
    %858 = vset.pattern.permute.xlu0 %v856
    %859 = vperm.xlu0 %858, %v854
    %v860 = vpop.permute.xlu0 %859
    %v861 = vperm.slane %v839, 3
    %v862 = vlaneseq
    %v863 = vshrl.u32 %v862, 7
    %865 = vset.pattern.permute.xlu0 %v863
    %866 = vperm.xlu0 %865, %v861
    %v867 = vpop.permute.xlu0 %866
    %v868 = vperm.slane %v839, 4
    %v869 = vlaneseq
    %v870 = vshrl.u32 %v869, 7
    %872 = vset.pattern.permute.xlu0 %v870
    %873 = vperm.xlu0 %872, %v868
    %v874 = vpop.permute.xlu0 %873
    %v875 = vperm.slane %v839, 5
    %v876 = vlaneseq
    %v877 = vshrl.u32 %v876, 7
    %879 = vset.pattern.permute.xlu0 %v877
    %880 = vperm.xlu0 %879, %v875
    %v881 = vpop.permute.xlu0 %880
    %v882 = vperm.slane %v839, 6
    %v883 = vlaneseq
    %v884 = vshrl.u32 %v883, 7
    %886 = vset.pattern.permute.xlu0 %v884
    %887 = vperm.xlu0 %886, %v882
    %v888 = vpop.permute.xlu0 %887
    %v889 = vperm.slane %v839, 7
    %v890 = vlaneseq
    %v891 = vshrl.u32 %v890, 7
    %893 = vset.pattern.permute.xlu0 %v891
    %894 = vperm.xlu0 %893, %v889
    %v895 = vpop.permute.xlu0 %894
    %v896 = vmul.f32 %v812, %v846
    %v897 = vmul.f32 %v813, %v846
    %v898 = vmul.f32 %v814, %v853
    %v899 = vmul.f32 %v815, %v853
    %v900 = vmul.f32 %v816, %v860
    %v901 = vmul.f32 %v817, %v860
    %v902 = vmul.f32 %v818, %v867
    %v903 = vmul.f32 %v819, %v867
    %v904 = vmul.f32 %v820, %v874
    %v905 = vmul.f32 %v821, %v874
    %v906 = vmul.f32 %v822, %v881
    %v907 = vmul.f32 %v823, %v881
    %v908 = vmul.f32 %v824, %v888
    %v909 = vmul.f32 %v825, %v888
    %v910 = vmul.f32 %v826, %v895
    %v911 = vmul.f32 %v827, %v895
    %v912 = vrot.slane %v896, 4
    %v913 = vmax.f32 %v896, %v912
    %v914 = vrot.slane %v913, 2
    %v915 = vmax.f32 %v913, %v914
    %v916 = vrot.slane %v915, 1
    %v917 = vmax.f32 %v915, %v916
    %v918 = vrot.slane %v897, 4
    %v919 = vmax.f32 %v897, %v918
    %v920 = vrot.slane %v919, 2
    %v921 = vmax.f32 %v919, %v920
    %v922 = vrot.slane %v921, 1
    %v923 = vmax.f32 %v921, %v922
    %v924 = vrot.slane %v898, 4
    %v925 = vmax.f32 %v898, %v924
    %v926 = vrot.slane %v925, 2
    %v927 = vmax.f32 %v925, %v926
    %v928 = vrot.slane %v927, 1
    %v929 = vmax.f32 %v927, %v928
    %v930 = vrot.slane %v899, 4
    %v931 = vmax.f32 %v899, %v930
    %v932 = vrot.slane %v931, 2
    %v933 = vmax.f32 %v931, %v932
    %v934 = vrot.slane %v933, 1
    %v935 = vmax.f32 %v933, %v934
    %v936 = vrot.slane %v900, 4
    %v937 = vmax.f32 %v900, %v936
    %v938 = vrot.slane %v937, 2
    %v939 = vmax.f32 %v937, %v938
    %v940 = vrot.slane %v939, 1
    %v941 = vmax.f32 %v939, %v940
    %v942 = vrot.slane %v901, 4
    %v943 = vmax.f32 %v901, %v942
    %v944 = vrot.slane %v943, 2
    %v945 = vmax.f32 %v943, %v944
    %v946 = vrot.slane %v945, 1
    %v947 = vmax.f32 %v945, %v946
    %v948 = vrot.slane %v902, 4
    %v949 = vmax.f32 %v902, %v948
    %v950 = vrot.slane %v949, 2
    %v951 = vmax.f32 %v949, %v950
    %v952 = vrot.slane %v951, 1
    %v953 = vmax.f32 %v951, %v952
    %v954 = vrot.slane %v903, 4
    %v955 = vmax.f32 %v903, %v954
    %v956 = vrot.slane %v955, 2
    %v957 = vmax.f32 %v955, %v956
    %v958 = vrot.slane %v957, 1
    %v959 = vmax.f32 %v957, %v958
    %v960 = vrot.slane %v904, 4
    %v961 = vmax.f32 %v904, %v960
    %v962 = vrot.slane %v961, 2
    %v963 = vmax.f32 %v961, %v962
    %v964 = vrot.slane %v963, 1
    %v965 = vmax.f32 %v963, %v964
    %v966 = vrot.slane %v905, 4
    %v967 = vmax.f32 %v905, %v966
    %v968 = vrot.slane %v967, 2
    %v969 = vmax.f32 %v967, %v968
    %v970 = vrot.slane %v969, 1
    %v971 = vmax.f32 %v969, %v970
    %v972 = vrot.slane %v906, 4
    %v973 = vmax.f32 %v906, %v972
    %v974 = vrot.slane %v973, 2
    %v975 = vmax.f32 %v973, %v974
    %v976 = vrot.slane %v975, 1
    %v977 = vmax.f32 %v975, %v976
    %v978 = vrot.slane %v907, 4
    %v979 = vmax.f32 %v907, %v978
    %v980 = vrot.slane %v979, 2
    %v981 = vmax.f32 %v979, %v980
    %v982 = vrot.slane %v981, 1
    %v983 = vmax.f32 %v981, %v982
    %v984 = vrot.slane %v908, 4
    %v985 = vmax.f32 %v908, %v984
    %v986 = vrot.slane %v985, 2
    %v987 = vmax.f32 %v985, %v986
    %v988 = vrot.slane %v987, 1
    %v989 = vmax.f32 %v987, %v988
    %v990 = vrot.slane %v909, 4
    %v991 = vmax.f32 %v909, %v990
    %v992 = vrot.slane %v991, 2
    %v993 = vmax.f32 %v991, %v992
    %v994 = vrot.slane %v993, 1
    %v995 = vmax.f32 %v993, %v994
    %v996 = vrot.slane %v910, 4
    %v997 = vmax.f32 %v910, %v996
    %v998 = vrot.slane %v997, 2
    %v999 = vmax.f32 %v997, %v998
    %v1000 = vrot.slane %v999, 1
    %v1001 = vmax.f32 %v999, %v1000
    %v1002 = vrot.slane %v911, 4
    %v1003 = vmax.f32 %v911, %v1002
    %v1004 = vrot.slane %v1003, 2
    %v1005 = vmax.f32 %v1003, %v1004
    %v1006 = vrot.slane %v1005, 1
    %v1007 = vmax.f32 %v1005, %v1006
    %v1008 = vld [vmem:[#allocation10] sm:$0xff]
    %v1009 = vld [vmem:[#allocation10 + $0x8] sm:$0xff]
    %v1010 = vld [vmem:[#allocation10 + $0x10] sm:$0xff]
    %v1011 = vld [vmem:[#allocation10 + $0x18] sm:$0xff]
    %v1012 = vld [vmem:[#allocation10 + $0x20] sm:$0xff]
    %v1013 = vld [vmem:[#allocation10 + $0x28] sm:$0xff]
    %v1014 = vld [vmem:[#allocation10 + $0x30] sm:$0xff]
    %v1015 = vld [vmem:[#allocation10 + $0x38] sm:$0xff]
    %v1016 = vld [vmem:[#allocation10 + $0x40] sm:$0xff]
    %v1017 = vld [vmem:[#allocation10 + $0x48] sm:$0xff]
    %v1018 = vld [vmem:[#allocation10 + $0x50] sm:$0xff]
    %v1019 = vld [vmem:[#allocation10 + $0x58] sm:$0xff]
    %v1020 = vld [vmem:[#allocation10 + $0x60] sm:$0xff]
    %v1021 = vld [vmem:[#allocation10 + $0x68] sm:$0xff]
    %v1022 = vld [vmem:[#allocation10 + $0x70] sm:$0xff]
    %v1023 = vld [vmem:[#allocation10 + $0x78] sm:$0xff]
    %v1024 = vld [vmem:[#allocation10 + $0x80] sm:$0xff]
    %v1025 = vld [vmem:[#allocation10 + $0x88] sm:$0xff]
    %v1026 = vld [vmem:[#allocation10 + $0x90] sm:$0xff]
    %v1027 = vld [vmem:[#allocation10 + $0x98] sm:$0xff]
    %v1028 = vld [vmem:[#allocation10 + $0xa0] sm:$0xff]
    %v1029 = vld [vmem:[#allocation10 + $0xa8] sm:$0xff]
    %v1030 = vld [vmem:[#allocation10 + $0xb0] sm:$0xff]
    %v1031 = vld [vmem:[#allocation10 + $0xb8] sm:$0xff]
    %v1032 = vld [vmem:[#allocation10 + $0xc0] sm:$0xff]
    %v1033 = vld [vmem:[#allocation10 + $0xc8] sm:$0xff]
    %v1034 = vld [vmem:[#allocation10 + $0xd0] sm:$0xff]
    %v1035 = vld [vmem:[#allocation10 + $0xd8] sm:$0xff]
    %v1036 = vld [vmem:[#allocation10 + $0xe0] sm:$0xff]
    %v1037 = vld [vmem:[#allocation10 + $0xe8] sm:$0xff]
    %v1038 = vld [vmem:[#allocation10 + $0xf0] sm:$0xff]
    %v1039 = vld [vmem:[#allocation10 + $0xf8] sm:$0xff]
    %v1040 = vld [vmem:[#allocation10 + $0x100] sm:$0xff]
    %v1041 = vld [vmem:[#allocation10 + $0x108] sm:$0xff]
    %v1042 = vld [vmem:[#allocation10 + $0x110] sm:$0xff]
    %v1043 = vld [vmem:[#allocation10 + $0x118] sm:$0xff]
    %v1044 = vld [vmem:[#allocation10 + $0x120] sm:$0xff]
    %v1045 = vld [vmem:[#allocation10 + $0x128] sm:$0xff]
    %v1046 = vld [vmem:[#allocation10 + $0x130] sm:$0xff]
    %v1047 = vld [vmem:[#allocation10 + $0x138] sm:$0xff]
    %v1048 = vld [vmem:[#allocation10 + $0x140] sm:$0xff]
    %v1049 = vld [vmem:[#allocation10 + $0x148] sm:$0xff]
    %v1050 = vld [vmem:[#allocation10 + $0x150] sm:$0xff]
    %v1051 = vld [vmem:[#allocation10 + $0x158] sm:$0xff]
    %v1052 = vld [vmem:[#allocation10 + $0x160] sm:$0xff]
    %v1053 = vld [vmem:[#allocation10 + $0x168] sm:$0xff]
    %v1054 = vld [vmem:[#allocation10 + $0x170] sm:$0xff]
    %v1055 = vld [vmem:[#allocation10 + $0x178] sm:$0xff]
    %v1056 = vld [vmem:[#allocation10 + $0x180] sm:$0xff]
    %v1057 = vld [vmem:[#allocation10 + $0x188] sm:$0xff]
    %v1058 = vld [vmem:[#allocation10 + $0x190] sm:$0xff]
    %v1059 = vld [vmem:[#allocation10 + $0x198] sm:$0xff]
    %v1060 = vld [vmem:[#allocation10 + $0x1a0] sm:$0xff]
    %v1061 = vld [vmem:[#allocation10 + $0x1a8] sm:$0xff]
    %v1062 = vld [vmem:[#allocation10 + $0x1b0] sm:$0xff]
    %v1063 = vld [vmem:[#allocation10 + $0x1b8] sm:$0xff]
    %v1064 = vld [vmem:[#allocation10 + $0x1c0] sm:$0xff]
    %v1065 = vld [vmem:[#allocation10 + $0x1c8] sm:$0xff]
    %v1066 = vld [vmem:[#allocation10 + $0x1d0] sm:$0xff]
    %v1067 = vld [vmem:[#allocation10 + $0x1d8] sm:$0xff]
    %v1068 = vld [vmem:[#allocation10 + $0x1e0] sm:$0xff]
    %v1069 = vld [vmem:[#allocation10 + $0x1e8] sm:$0xff]
    %v1070 = vld [vmem:[#allocation10 + $0x1f0] sm:$0xff]
    %v1071 = vld [vmem:[#allocation10 + $0x1f8] sm:$0xff]
    %v1072 = vld [vmem:[#allocation10 + $0x200] sm:$0xff]
    %v1073 = vld [vmem:[#allocation10 + $0x208] sm:$0xff]
    %v1074 = vld [vmem:[#allocation10 + $0x210] sm:$0xff]
    %v1075 = vld [vmem:[#allocation10 + $0x218] sm:$0xff]
    %v1076 = vld [vmem:[#allocation10 + $0x220] sm:$0xff]
    %v1077 = vld [vmem:[#allocation10 + $0x228] sm:$0xff]
    %v1078 = vld [vmem:[#allocation10 + $0x230] sm:$0xff]
    %v1079 = vld [vmem:[#allocation10 + $0x238] sm:$0xff]
    %v1080 = vld [vmem:[#allocation10 + $0x240] sm:$0xff]
    %v1081 = vld [vmem:[#allocation10 + $0x248] sm:$0xff]
    %v1082 = vld [vmem:[#allocation10 + $0x250] sm:$0xff]
    %v1083 = vld [vmem:[#allocation10 + $0x258] sm:$0xff]
    %v1084 = vld [vmem:[#allocation10 + $0x260] sm:$0xff]
    %v1085 = vld [vmem:[#allocation10 + $0x268] sm:$0xff]
    %v1086 = vld [vmem:[#allocation10 + $0x270] sm:$0xff]
    %v1087 = vld [vmem:[#allocation10 + $0x278] sm:$0xff]
    %v1088 = vld [vmem:[#allocation10 + $0x280] sm:$0xff]
    %v1089 = vld [vmem:[#allocation10 + $0x288] sm:$0xff]
    %v1090 = vld [vmem:[#allocation10 + $0x290] sm:$0xff]
    %v1091 = vld [vmem:[#allocation10 + $0x298] sm:$0xff]
    %v1092 = vld [vmem:[#allocation10 + $0x2a0] sm:$0xff]
    %v1093 = vld [vmem:[#allocation10 + $0x2a8] sm:$0xff]
    %v1094 = vld [vmem:[#allocation10 + $0x2b0] sm:$0xff]
    %v1095 = vld [vmem:[#allocation10 + $0x2b8] sm:$0xff]
    %v1096 = vld [vmem:[#allocation10 + $0x2c0] sm:$0xff]
    %v1097 = vld [vmem:[#allocation10 + $0x2c8] sm:$0xff]
    %v1098 = vld [vmem:[#allocation10 + $0x2d0] sm:$0xff]
    %v1099 = vld [vmem:[#allocation10 + $0x2d8] sm:$0xff]
    %v1100 = vld [vmem:[#allocation10 + $0x2e0] sm:$0xff]
    %v1101 = vld [vmem:[#allocation10 + $0x2e8] sm:$0xff]
    %v1102 = vld [vmem:[#allocation10 + $0x2f0] sm:$0xff]
    %v1103 = vld [vmem:[#allocation10 + $0x2f8] sm:$0xff]
    %v1104 = vld [vmem:[#allocation10 + $0x300] sm:$0xff]
    %v1105 = vld [vmem:[#allocation10 + $0x308] sm:$0xff]
    %v1106 = vld [vmem:[#allocation10 + $0x310] sm:$0xff]
    %v1107 = vld [vmem:[#allocation10 + $0x318] sm:$0xff]
    %v1108 = vld [vmem:[#allocation10 + $0x320] sm:$0xff]
    %v1109 = vld [vmem:[#allocation10 + $0x328] sm:$0xff]
    %v1110 = vld [vmem:[#allocation10 + $0x330] sm:$0xff]
    %v1111 = vld [vmem:[#allocation10 + $0x338] sm:$0xff]
    %v1112 = vld [vmem:[#allocation10 + $0x340] sm:$0xff]
    %v1113 = vld [vmem:[#allocation10 + $0x348] sm:$0xff]
    %v1114 = vld [vmem:[#allocation10 + $0x350] sm:$0xff]
    %v1115 = vld [vmem:[#allocation10 + $0x358] sm:$0xff]
    %v1116 = vld [vmem:[#allocation10 + $0x360] sm:$0xff]
    %v1117 = vld [vmem:[#allocation10 + $0x368] sm:$0xff]
    %v1118 = vld [vmem:[#allocation10 + $0x370] sm:$0xff]
    %v1119 = vld [vmem:[#allocation10 + $0x378] sm:$0xff]
    %v1120 = vld [vmem:[#allocation10 + $0x380] sm:$0xff]
    %v1121 = vld [vmem:[#allocation10 + $0x388] sm:$0xff]
    %v1122 = vld [vmem:[#allocation10 + $0x390] sm:$0xff]
    %v1123 = vld [vmem:[#allocation10 + $0x398] sm:$0xff]
    %v1124 = vld [vmem:[#allocation10 + $0x3a0] sm:$0xff]
    %v1125 = vld [vmem:[#allocation10 + $0x3a8] sm:$0xff]
    %v1126 = vld [vmem:[#allocation10 + $0x3b0] sm:$0xff]
    %v1127 = vld [vmem:[#allocation10 + $0x3b8] sm:$0xff]
    %v1128 = vld [vmem:[#allocation10 + $0x3c0] sm:$0xff]
    %v1129 = vld [vmem:[#allocation10 + $0x3c8] sm:$0xff]
    %v1130 = vld [vmem:[#allocation10 + $0x3d0] sm:$0xff]
    %v1131 = vld [vmem:[#allocation10 + $0x3d8] sm:$0xff]
    %v1132 = vld [vmem:[#allocation10 + $0x3e0] sm:$0xff]
    %v1133 = vld [vmem:[#allocation10 + $0x3e8] sm:$0xff]
    %v1134 = vld [vmem:[#allocation10 + $0x3f0] sm:$0xff]
    %v1135 = vld [vmem:[#allocation10 + $0x3f8] sm:$0xff]
    %v1136 = vld [vmem:[#allocation10 + $0x400] sm:$0xff]
    %v1137 = vld [vmem:[#allocation10 + $0x408] sm:$0xff]
    %v1138 = vld [vmem:[#allocation10 + $0x410] sm:$0xff]
    %v1139 = vld [vmem:[#allocation10 + $0x418] sm:$0xff]
    %v1140 = vld [vmem:[#allocation10 + $0x420] sm:$0xff]
    %v1141 = vld [vmem:[#allocation10 + $0x428] sm:$0xff]
    %v1142 = vld [vmem:[#allocation10 + $0x430] sm:$0xff]
    %v1143 = vld [vmem:[#allocation10 + $0x438] sm:$0xff]
    %v1144 = vld [vmem:[#allocation10 + $0x440] sm:$0xff]
    %v1145 = vld [vmem:[#allocation10 + $0x448] sm:$0xff]
    %v1146 = vld [vmem:[#allocation10 + $0x450] sm:$0xff]
    %v1147 = vld [vmem:[#allocation10 + $0x458] sm:$0xff]
    %v1148 = vld [vmem:[#allocation10 + $0x460] sm:$0xff]
    %v1149 = vld [vmem:[#allocation10 + $0x468] sm:$0xff]
    %v1150 = vld [vmem:[#allocation10 + $0x470] sm:$0xff]
    %v1151 = vld [vmem:[#allocation10 + $0x478] sm:$0xff]
    %v1152 = vld [vmem:[#allocation10 + $0x480] sm:$0xff]
    %v1153 = vld [vmem:[#allocation10 + $0x488] sm:$0xff]
    %v1154 = vld [vmem:[#allocation10 + $0x490] sm:$0xff]
    %v1155 = vld [vmem:[#allocation10 + $0x498] sm:$0xff]
    %v1156 = vld [vmem:[#allocation10 + $0x4a0] sm:$0xff]
    %v1157 = vld [vmem:[#allocation10 + $0x4a8] sm:$0xff]
    %v1158 = vld [vmem:[#allocation10 + $0x4b0] sm:$0xff]
    %v1159 = vld [vmem:[#allocation10 + $0x4b8] sm:$0xff]
    %v1160 = vld [vmem:[#allocation10 + $0x4c0] sm:$0xff]
    %v1161 = vld [vmem:[#allocation10 + $0x4c8] sm:$0xff]
    %v1162 = vld [vmem:[#allocation10 + $0x4d0] sm:$0xff]
    %v1163 = vld [vmem:[#allocation10 + $0x4d8] sm:$0xff]
    %v1164 = vld [vmem:[#allocation10 + $0x4e0] sm:$0xff]
    %v1165 = vld [vmem:[#allocation10 + $0x4e8] sm:$0xff]
    %v1166 = vld [vmem:[#allocation10 + $0x4f0] sm:$0xff]
    %v1167 = vld [vmem:[#allocation10 + $0x4f8] sm:$0xff]
    %v1168 = vld [vmem:[#allocation10 + $0x500] sm:$0xff]
    %v1169 = vld [vmem:[#allocation10 + $0x508] sm:$0xff]
    %v1170 = vld [vmem:[#allocation10 + $0x510] sm:$0xff]
    %v1171 = vld [vmem:[#allocation10 + $0x518] sm:$0xff]
    %v1172 = vld [vmem:[#allocation10 + $0x520] sm:$0xff]
    %v1173 = vld [vmem:[#allocation10 + $0x528] sm:$0xff]
    %v1174 = vld [vmem:[#allocation10 + $0x530] sm:$0xff]
    %v1175 = vld [vmem:[#allocation10 + $0x538] sm:$0xff]
    %v1176 = vld [vmem:[#allocation10 + $0x540] sm:$0xff]
    %v1177 = vld [vmem:[#allocation10 + $0x548] sm:$0xff]
    %v1178 = vld [vmem:[#allocation10 + $0x550] sm:$0xff]
    %v1179 = vld [vmem:[#allocation10 + $0x558] sm:$0xff]
    %v1180 = vld [vmem:[#allocation10 + $0x560] sm:$0xff]
    %v1181 = vld [vmem:[#allocation10 + $0x568] sm:$0xff]
    %v1182 = vld [vmem:[#allocation10 + $0x570] sm:$0xff]
    %v1183 = vld [vmem:[#allocation10 + $0x578] sm:$0xff]
    %v1184 = vld [vmem:[#allocation10 + $0x580] sm:$0xff]
    %v1185 = vld [vmem:[#allocation10 + $0x588] sm:$0xff]
    %v1186 = vld [vmem:[#allocation10 + $0x590] sm:$0xff]
    %v1187 = vld [vmem:[#allocation10 + $0x598] sm:$0xff]
    %v1188 = vld [vmem:[#allocation10 + $0x5a0] sm:$0xff]
    %v1189 = vld [vmem:[#allocation10 + $0x5a8] sm:$0xff]
    %v1190 = vld [vmem:[#allocation10 + $0x5b0] sm:$0xff]
    %v1191 = vld [vmem:[#allocation10 + $0x5b8] sm:$0xff]
    %v1192 = vld [vmem:[#allocation10 + $0x5c0] sm:$0xff]
    %v1193 = vld [vmem:[#allocation10 + $0x5c8] sm:$0xff]
    %v1194 = vld [vmem:[#allocation10 + $0x5d0] sm:$0xff]
    %v1195 = vld [vmem:[#allocation10 + $0x5d8] sm:$0xff]
    %v1196 = vld [vmem:[#allocation10 + $0x5e0] sm:$0xff]
    %v1197 = vld [vmem:[#allocation10 + $0x5e8] sm:$0xff]
    %v1198 = vld [vmem:[#allocation10 + $0x5f0] sm:$0xff]
    %v1199 = vld [vmem:[#allocation10 + $0x5f8] sm:$0xff]
    %v1200 = vld [vmem:[%s5] sm:$0x3f]
    %v1202 = vperm.slane %v1200, 0
    %v1203 = vperm.slane %v1200, 1
    %v1204 = vperm.slane %v1200, 2
    %v1205 = vperm.slane %v1200, 3
    %v1206 = vperm.slane %v1200, 4
    %v1207 = vperm.slane %v1200, 5
    %v1230 = vsel %vm417, %v929, %v917
    %v1231 = vsel %vm420, %v941, %v1230
    %v1232 = vsel %vm423, %v953, %v1231
    %v1233 = vsel %vm426, %v965, %v1232
    %v1234 = vsel %vm429, %v977, %v1233
    %v1235 = vsel %vm432, %v989, %v1234
    %vm1236 = vcmask 1047559
    %v1237 = vsel %vm1236, %v1001, %v1235
    %v1238 = vsel %vm417, %v935, %v923
    %v1239 = vsel %vm420, %v947, %v1238
    %v1240 = vsel %vm423, %v959, %v1239
    %v1241 = vsel %vm426, %v971, %v1240
    %v1242 = vsel %vm429, %v983, %v1241
    %v1243 = vsel %vm432, %v995, %v1242
    %v1244 = vsel %vm1236, %v1007, %v1243
    %1247 = vmatpush.msra.mxu0 %v1098
    %1248 = vmatpush.msra.mxu0 %v1092
    %1249 = vmatpush.msra.mxu0 %v1086
    %1250 = vmatpush.msra.mxu0 %v1080
    %1251 = vmatpush.msra.mxu0 %v1074
    %1252 = vmatpush.msra.mxu0 %v1068
    %1253 = vmatpush.msra.mxu0 %v1062
    %1254 = vmatpush.msra.mxu0 %v1056
    %1255 = vmatpush.msra.mxu0 %v1050
    %1256 = vmatpush.msra.mxu0 %v1044
    %1257 = vmatpush.msra.mxu0 %v1038
    %1258 = vmatpush.msra.mxu0 %v1032
    %1259 = vmatpush.msra.mxu0 %v1026
    %1260 = vmatpush.msra.mxu0 %v1020
    %1261 = vmatpush.msra.mxu0 %v1014
    %1262 = vmatpush.msra.mxu0 %v1008
    %1263 = vmatmul.f32.gmra.mxu0 %v1237
    %v1264 = vpop.f32.mrf.mxu0
    %v1265 = vadd.f32 %v1202, %v1264
    %1266 = vdwg.mxu0
    %1267 = vmatpush.msra.mxu0 %v1194
    %1268 = vmatpush.msra.mxu0 %v1188
    %1269 = vmatpush.msra.mxu0 %v1182
    %1270 = vmatpush.msra.mxu0 %v1176
    %1271 = vmatpush.msra.mxu0 %v1170
    %1272 = vmatpush.msra.mxu0 %v1164
    %1273 = vmatpush.msra.mxu0 %v1158
    %1274 = vmatpush.msra.mxu0 %v1152
    %1275 = vmatpush.msra.mxu0 %v1146
    %1276 = vmatpush.msra.mxu0 %v1140
    %1277 = vmatpush.msra.mxu0 %v1134
    %1278 = vmatpush.msra.mxu0 %v1128
    %1279 = vmatpush.msra.mxu0 %v1122
    %1280 = vmatpush.msra.mxu0 %v1116
    %1281 = vmatpush.msra.mxu0 %v1110
    %1282 = vmatpush.msra.mxu0 %v1104
    %1283 = vmatmul.f32.gmra.mxu0 %v1244
    %v1284 = vpop.f32.mrf.mxu0
    %v1285 = vadd.f32 %v1265, %v1284
    %1286 = vdwg.mxu0
    %1287 = vmatpush.msra.mxu0 %v1099
    %1288 = vmatpush.msra.mxu0 %v1093
    %1289 = vmatpush.msra.mxu0 %v1087
    %1290 = vmatpush.msra.mxu0 %v1081
    %1291 = vmatpush.msra.mxu0 %v1075
    %1292 = vmatpush.msra.mxu0 %v1069
    %1293 = vmatpush.msra.mxu0 %v1063
    %1294 = vmatpush.msra.mxu0 %v1057
    %1295 = vmatpush.msra.mxu0 %v1051
    %1296 = vmatpush.msra.mxu0 %v1045
    %1297 = vmatpush.msra.mxu0 %v1039
    %1298 = vmatpush.msra.mxu0 %v1033
    %1299 = vmatpush.msra.mxu0 %v1027
    %1300 = vmatpush.msra.mxu0 %v1021
    %1301 = vmatpush.msra.mxu0 %v1015
    %1302 = vmatpush.msra.mxu0 %v1009
    %1303 = vmatmul.f32.gmra.mxu0 %v1237
    %v1304 = vpop.f32.mrf.mxu0
    %v1305 = vadd.f32 %v1203, %v1304
    %1306 = vdwg.mxu0
    %1307 = vmatpush.msra.mxu0 %v1195
    %1308 = vmatpush.msra.mxu0 %v1189
    %1309 = vmatpush.msra.mxu0 %v1183
    %1310 = vmatpush.msra.mxu0 %v1177
    %1311 = vmatpush.msra.mxu0 %v1171
    %1312 = vmatpush.msra.mxu0 %v1165
    %1313 = vmatpush.msra.mxu0 %v1159
    %1314 = vmatpush.msra.mxu0 %v1153
    %1315 = vmatpush.msra.mxu0 %v1147
    %1316 = vmatpush.msra.mxu0 %v1141
    %1317 = vmatpush.msra.mxu0 %v1135
    %1318 = vmatpush.msra.mxu0 %v1129
    %1319 = vmatpush.msra.mxu0 %v1123
    %1320 = vmatpush.msra.mxu0 %v1117
    %1321 = vmatpush.msra.mxu0 %v1111
    %1322 = vmatpush.msra.mxu0 %v1105
    %1323 = vmatmul.f32.gmra.mxu0 %v1244
    %v1324 = vpop.f32.mrf.mxu0
    %v1325 = vadd.f32 %v1305, %v1324
    %1326 = vdwg.mxu0
    %1327 = vmatpush.msra.mxu0 %v1100
    %1328 = vmatpush.msra.mxu0 %v1094
    %1329 = vmatpush.msra.mxu0 %v1088
    %1330 = vmatpush.msra.mxu0 %v1082
    %1331 = vmatpush.msra.mxu0 %v1076
    %1332 = vmatpush.msra.mxu0 %v1070
    %1333 = vmatpush.msra.mxu0 %v1064
    %1334 = vmatpush.msra.mxu0 %v1058
    %1335 = vmatpush.msra.mxu0 %v1052
    %1336 = vmatpush.msra.mxu0 %v1046
    %1337 = vmatpush.msra.mxu0 %v1040
    %1338 = vmatpush.msra.mxu0 %v1034
    %1339 = vmatpush.msra.mxu0 %v1028
    %1340 = vmatpush.msra.mxu0 %v1022
    %1341 = vmatpush.msra.mxu0 %v1016
    %1342 = vmatpush.msra.mxu0 %v1010
    %1343 = vmatmul.f32.gmra.mxu0 %v1237
    %v1344 = vpop.f32.mrf.mxu0
    %v1345 = vadd.f32 %v1204, %v1344
    %1346 = vdwg.mxu0
    %1347 = vmatpush.msra.mxu0 %v1196
    %1348 = vmatpush.msra.mxu0 %v1190
    %1349 = vmatpush.msra.mxu0 %v1184
    %1350 = vmatpush.msra.mxu0 %v1178
    %1351 = vmatpush.msra.mxu0 %v1172
    %1352 = vmatpush.msra.mxu0 %v1166
    %1353 = vmatpush.msra.mxu0 %v1160
    %1354 = vmatpush.msra.mxu0 %v1154
    %1355 = vmatpush.msra.mxu0 %v1148
    %1356 = vmatpush.msra.mxu0 %v1142
    %1357 = vmatpush.msra.mxu0 %v1136
    %1358 = vmatpush.msra.mxu0 %v1130
    %1359 = vmatpush.msra.mxu0 %v1124
    %1360 = vmatpush.msra.mxu0 %v1118
    %1361 = vmatpush.msra.mxu0 %v1112
    %1362 = vmatpush.msra.mxu0 %v1106
    %1363 = vmatmul.f32.gmra.mxu0 %v1244
    %v1364 = vpop.f32.mrf.mxu0
    %v1365 = vadd.f32 %v1345, %v1364
    %1366 = vdwg.mxu0
    %1367 = vmatpush.msra.mxu0 %v1101
    %1368 = vmatpush.msra.mxu0 %v1095
    %1369 = vmatpush.msra.mxu0 %v1089
    %1370 = vmatpush.msra.mxu0 %v1083
    %1371 = vmatpush.msra.mxu0 %v1077
    %1372 = vmatpush.msra.mxu0 %v1071
    %1373 = vmatpush.msra.mxu0 %v1065
    %1374 = vmatpush.msra.mxu0 %v1059
    %1375 = vmatpush.msra.mxu0 %v1053
    %1376 = vmatpush.msra.mxu0 %v1047
    %1377 = vmatpush.msra.mxu0 %v1041
    %1378 = vmatpush.msra.mxu0 %v1035
    %1379 = vmatpush.msra.mxu0 %v1029
    %1380 = vmatpush.msra.mxu0 %v1023
    %1381 = vmatpush.msra.mxu0 %v1017
    %1382 = vmatpush.msra.mxu0 %v1011
    %1383 = vmatmul.f32.gmra.mxu0 %v1237
    %v1384 = vpop.f32.mrf.mxu0
    %v1385 = vadd.f32 %v1205, %v1384
    %1386 = vdwg.mxu0
    %1387 = vmatpush.msra.mxu0 %v1197
    %1388 = vmatpush.msra.mxu0 %v1191
    %1389 = vmatpush.msra.mxu0 %v1185
    %1390 = vmatpush.msra.mxu0 %v1179
    %1391 = vmatpush.msra.mxu0 %v1173
    %1392 = vmatpush.msra.mxu0 %v1167
    %1393 = vmatpush.msra.mxu0 %v1161
    %1394 = vmatpush.msra.mxu0 %v1155
    %1395 = vmatpush.msra.mxu0 %v1149
    %1396 = vmatpush.msra.mxu0 %v1143
    %1397 = vmatpush.msra.mxu0 %v1137
    %1398 = vmatpush.msra.mxu0 %v1131
    %1399 = vmatpush.msra.mxu0 %v1125
    %1400 = vmatpush.msra.mxu0 %v1119
    %1401 = vmatpush.msra.mxu0 %v1113
    %1402 = vmatpush.msra.mxu0 %v1107
    %1403 = vmatmul.f32.gmra.mxu0 %v1244
    %v1404 = vpop.f32.mrf.mxu0
    %v1405 = vadd.f32 %v1385, %v1404
    %1406 = vdwg.mxu0
    %1407 = vmatpush.msra.mxu0 %v1102
    %1408 = vmatpush.msra.mxu0 %v1096
    %1409 = vmatpush.msra.mxu0 %v1090
    %1410 = vmatpush.msra.mxu0 %v1084
    %1411 = vmatpush.msra.mxu0 %v1078
    %1412 = vmatpush.msra.mxu0 %v1072
    %1413 = vmatpush.msra.mxu0 %v1066
    %1414 = vmatpush.msra.mxu0 %v1060
    %1415 = vmatpush.msra.mxu0 %v1054
    %1416 = vmatpush.msra.mxu0 %v1048
    %1417 = vmatpush.msra.mxu0 %v1042
    %1418 = vmatpush.msra.mxu0 %v1036
    %1419 = vmatpush.msra.mxu0 %v1030
    %1420 = vmatpush.msra.mxu0 %v1024
    %1421 = vmatpush.msra.mxu0 %v1018
    %1422 = vmatpush.msra.mxu0 %v1012
    %1423 = vmatmul.f32.gmra.mxu0 %v1237
    %v1424 = vpop.f32.mrf.mxu0
    %v1425 = vadd.f32 %v1206, %v1424
    %1426 = vdwg.mxu0
    %1427 = vmatpush.msra.mxu0 %v1198
    %1428 = vmatpush.msra.mxu0 %v1192
    %1429 = vmatpush.msra.mxu0 %v1186
    %1430 = vmatpush.msra.mxu0 %v1180
    %1431 = vmatpush.msra.mxu0 %v1174
    %1432 = vmatpush.msra.mxu0 %v1168
    %1433 = vmatpush.msra.mxu0 %v1162
    %1434 = vmatpush.msra.mxu0 %v1156
    %1435 = vmatpush.msra.mxu0 %v1150
    %1436 = vmatpush.msra.mxu0 %v1144
    %1437 = vmatpush.msra.mxu0 %v1138
    %1438 = vmatpush.msra.mxu0 %v1132
    %1439 = vmatpush.msra.mxu0 %v1126
    %1440 = vmatpush.msra.mxu0 %v1120
    %1441 = vmatpush.msra.mxu0 %v1114
    %1442 = vmatpush.msra.mxu0 %v1108
    %1443 = vmatmul.f32.gmra.mxu0 %v1244
    %v1444 = vpop.f32.mrf.mxu0
    %v1445 = vadd.f32 %v1425, %v1444
    %1446 = vdwg.mxu0
    %1447 = vmatpush.msra.mxu0 %v1103
    %1448 = vmatpush.msra.mxu0 %v1097
    %1449 = vmatpush.msra.mxu0 %v1091
    %1450 = vmatpush.msra.mxu0 %v1085
    %1451 = vmatpush.msra.mxu0 %v1079
    %1452 = vmatpush.msra.mxu0 %v1073
    %1453 = vmatpush.msra.mxu0 %v1067
    %1454 = vmatpush.msra.mxu0 %v1061
    %1455 = vmatpush.msra.mxu0 %v1055
    %1456 = vmatpush.msra.mxu0 %v1049
    %1457 = vmatpush.msra.mxu0 %v1043
    %1458 = vmatpush.msra.mxu0 %v1037
    %1459 = vmatpush.msra.mxu0 %v1031
    %1460 = vmatpush.msra.mxu0 %v1025
    %1461 = vmatpush.msra.mxu0 %v1019
    %1462 = vmatpush.msra.mxu0 %v1013
    %1463 = vmatmul.f32.gmra.mxu0 %v1237
    %v1464 = vpop.f32.mrf.mxu0
    %v1465 = vadd.f32 %v1207, %v1464
    %1466 = vdwg.mxu0
    %1467 = vmatpush.msra.mxu0 %v1199
    %1468 = vmatpush.msra.mxu0 %v1193
    %1469 = vmatpush.msra.mxu0 %v1187
    %1470 = vmatpush.msra.mxu0 %v1181
    %1471 = vmatpush.msra.mxu0 %v1175
    %1472 = vmatpush.msra.mxu0 %v1169
    %1473 = vmatpush.msra.mxu0 %v1163
    %1474 = vmatpush.msra.mxu0 %v1157
    %1475 = vmatpush.msra.mxu0 %v1151
    %1476 = vmatpush.msra.mxu0 %v1145
    %1477 = vmatpush.msra.mxu0 %v1139
    %1478 = vmatpush.msra.mxu0 %v1133
    %1479 = vmatpush.msra.mxu0 %v1127
    %1480 = vmatpush.msra.mxu0 %v1121
    %1481 = vmatpush.msra.mxu0 %v1115
    %1482 = vmatpush.msra.mxu0 %v1109
    %1483 = vmatmul.f32.gmra.mxu0 %v1244
    %v1484 = vpop.f32.mrf.mxu0
    %v1485 = vadd.f32 %v1465, %v1484
    %1486 = vdwg.mxu0
    %v1487 = vsub.f32 0.0, %v1285
    %v1488 = vsub.f32 0.0, %v1325
    %v1489 = vmul.f32 %v1487, 1.442695
    %v1490 = vpow.pop %v1489
    %v1491 = vmul.f32 %v1488, 1.442695
    %v1492 = vpow.pop %v1491
    %v1493 = vadd.f32 %v1490, 1.0
    %v1494 = vadd.f32 %v1492, 1.0
    %v1495 = vrcp.pop %v1493
    %v1496 = vmul.f32 %v1493, %v1495
    %v1497 = vsub.f32 1.0, %v1496
    %v1498 = vmul.f32 %v1495, %v1497
    %v1499 = vadd.f32 %v1495, %v1498
    %vm1500 = vweird.f32 %v1493
    %vm1501 = vweird.f32 %v1495
    %vm1502 = vmor %vm1500, %vm1501
    %v1503 = vsel %vm1502, %v1495, %v1499
    %v1504 = vand.u32 2147483647, %v1493
    %vm1505 = vcmp.eq.f32.partialorder %v1504, 8.507059e+37
    %v1506 = vand.u32 %v1493, 2147483648
    %v1507 = vor.u32 1.1754944e-38, %v1506
    %v1508 = vsel %vm1505, %v1507, %v1503
    %v1509 = vmul.f32 1.0, %v1508
    %v1510 = vrcp.pop %v1494
    %v1511 = vmul.f32 %v1494, %v1510
    %v1512 = vsub.f32 1.0, %v1511
    %v1513 = vmul.f32 %v1510, %v1512
    %v1514 = vadd.f32 %v1510, %v1513
    %vm1515 = vweird.f32 %v1494
    %vm1516 = vweird.f32 %v1510
    %vm1517 = vmor %vm1515, %vm1516
    %v1518 = vsel %vm1517, %v1510, %v1514
    %v1519 = vand.u32 2147483647, %v1494
    %vm1520 = vcmp.eq.f32.partialorder %v1519, 8.507059e+37
    %v1521 = vand.u32 %v1494, 2147483648
    %v1522 = vor.u32 1.1754944e-38, %v1521
    %v1523 = vsel %vm1520, %v1522, %v1518
    %v1524 = vmul.f32 1.0, %v1523
    %v1525 = vtanh.pop %v1365
    %v1526 = vtanh.pop %v1405
    %v1527 = vsub.f32 0.0, %v1445
    %v1528 = vsub.f32 0.0, %v1485
    %v1529 = vmul.f32 %v1527, 1.442695
    %v1530 = vpow.pop %v1529
    %v1531 = vmul.f32 %v1528, 1.442695
    %v1532 = vpow.pop %v1531
    %v1533 = vadd.f32 %v1530, 1.0
    %v1534 = vadd.f32 %v1532, 1.0
    %v1535 = vrcp.pop %v1533
    %v1536 = vmul.f32 %v1533, %v1535
    %v1537 = vsub.f32 1.0, %v1536
    %v1538 = vmul.f32 %v1535, %v1537
    %v1539 = vadd.f32 %v1535, %v1538
    %vm1540 = vweird.f32 %v1533
    %vm1541 = vweird.f32 %v1535
    %vm1542 = vmor %vm1540, %vm1541
    %v1543 = vsel %vm1542, %v1535, %v1539
    %v1544 = vand.u32 2147483647, %v1533
    %vm1545 = vcmp.eq.f32.partialorder %v1544, 8.507059e+37
    %v1546 = vand.u32 %v1533, 2147483648
    %v1547 = vor.u32 1.1754944e-38, %v1546
    %v1548 = vsel %vm1545, %v1547, %v1543
    %v1549 = vmul.f32 1.0, %v1548
    %v1550 = vrcp.pop %v1534
    %v1551 = vmul.f32 %v1534, %v1550
    %v1552 = vsub.f32 1.0, %v1551
    %v1553 = vmul.f32 %v1550, %v1552
    %v1554 = vadd.f32 %v1550, %v1553
    %vm1555 = vweird.f32 %v1534
    %vm1556 = vweird.f32 %v1550
    %vm1557 = vmor %vm1555, %vm1556
    %v1558 = vsel %vm1557, %v1550, %v1554
    %v1559 = vand.u32 2147483647, %v1534
    %vm1560 = vcmp.eq.f32.partialorder %v1559, 8.507059e+37
    %v1561 = vand.u32 %v1534, 2147483648
    %v1562 = vor.u32 1.1754944e-38, %v1561
    %v1563 = vsel %vm1560, %v1562, %v1558
    %v1564 = vmul.f32 1.0, %v1563
    %v1565 = vmul.f32 %v1509, %v1525
    %v1566 = vmul.f32 %v1524, %v1526
    %v1567 = vtanh.pop %v1565
    %v1568 = vtanh.pop %v1566
    %v1569 = vmul.f32 %v1549, %v1567
    %v1570 = vmul.f32 %v1564, %v1568
    %v1571 = vld [vmem:[#allocation12] sm:$0x3]
    %v1573 = vperm.slane %v1571, 0
    %v1574 = vperm.slane %v1571, 1
    %v1577 = vmul.f32 %v1569, %v1573
    %v1578 = vmul.f32 %v1570, %v1574
    %v1579 = vadd.f32 %v1577, %v1578
    %1580 = vadd.xlane.f32.xlu0 %v1579
    %v1581 = vpop.xlane.xlu0 %1580
    %v1582 = vld [vmem:[#allocation2] sm:$0x1]
    %v1584 = vperm.slane %v1582, 0
    %v1586 = vadd.f32 %v1581, %v1584
    %1588 = vset.pattern.permute.xlu0 0
    %1589 = vperm.xlu0 %1588, %v1586
    %v1590 = vpop.permute.xlu0 %1589
    %v1592 = vmul.f32 %v1569, %v1590
    %v1593 = vmul.f32 %v1570, %v1590
    %v1594 = vrot.slane %v1592, 4
    %v1595 = vadd.f32 %v1592, %v1594
    %v1596 = vrot.slane %v1595, 2
    %v1597 = vadd.f32 %v1595, %v1596
    %v1598 = vrot.slane %v1597, 1
    %v1599 = vadd.f32 %v1597, %v1598
    %v1600 = vrot.slane %v1593, 4
    %v1601 = vadd.f32 %v1593, %v1600
    %v1602 = vrot.slane %v1601, 2
    %v1603 = vadd.f32 %v1601, %v1602
    %v1604 = vrot.slane %v1603, 1
    %v1605 = vadd.f32 %v1603, %v1604
    %v1606 = vld [vmem:[%s8] sm:$0x3]
    %v1608 = vperm.slane %v1606, 0
    %v1609 = vperm.slane %v1606, 1
    %v1612 = vmul.f32 %v1599, %v1608
    %v1613 = vmul.f32 %v1605, %v1609
    %v1614 = vsel %vm415, %v1612, 0.0
    %v1615 = vsel %vm415, %v1613, 0.0
    %v1616 = vadd.f32 %v1614, %v1615
    %1617 = vadd.xlane.f32.xlu0 %v1616
    %v1618 = vpop.xlane.xlu0 %1617
    %v1619 = vld [vmem:[#allocation3] sm:$0x1]
    %v1620 = vadd.f32 %v1618, %v1619
    %v1621 = vsub.f32 0.0, %v1620
    %v1622 = vmul.f32 %v1621, 1.442695
    %v1623 = vpow.pop %v1622
    %v1624 = vadd.f32 %v1623, 1.0
    %v1625 = vrcp.pop %v1624
    %v1626 = vmul.f32 %v1624, %v1625
    %v1627 = vsub.f32 1.0, %v1626
    %v1628 = vmul.f32 %v1625, %v1627
    %v1629 = vadd.f32 %v1625, %v1628
    %vm1630 = vweird.f32 %v1624
    %vm1631 = vweird.f32 %v1625
    %vm1632 = vmor %vm1630, %vm1631
    %v1633 = vsel %vm1632, %v1625, %v1629
    %v1634 = vand.u32 2147483647, %v1624
    %vm1635 = vcmp.eq.f32.partialorder %v1634, 8.507059e+37
    %v1636 = vand.u32 %v1624, 2147483648
    %v1637 = vor.u32 1.1754944e-38, %v1636
    %v1638 = vsel %vm1635, %v1637, %v1633
    %v1639 = vmul.f32 1.0, %v1638
    %vm1640 = vcmask 0
    %1641 = vst.msk [vmem:[#allocation13] sm:$0x1] %vm1640, %v1639
    // Predicated region
    $region62: #{tpu_custom_call.1} parent=1 // pred_check
      _
    $region63: #{tpu_custom_call.1} parent=1 // pred_check_branch
      %1643 = sbr.rel (0) target = $region65
    $region64: #{tpu_custom_call.1} parent=1 // pred_region
      %1645 = vsyncadd [#allocation6], 0
      %s1647 = sshll.u32 [#allocation13], 4
      %s1648 = int_to_ptr.vmem [resolvable:$true] %s1647
      %s1649 = sshll.u32 %s10, 4
      %s1650 = int_to_ptr.hbm [resolvable:$true] %s1649
      %1652 = dma.vmem_to_hbm [thread:$0]  %s1648, 16, %s1650, [#allocation6]
    $region65: #{tpu_custom_call.1} parent=1 // pred_fallthru
      _
    // Predicated region
    $region66: #{tpu_custom_call.1} parent=1 // pred_check
      _
    $region67: #{tpu_custom_call.1} parent=1 // pred_check_branch
      %1654 = sbr.rel (0) target = $region69
    $region68: #{tpu_custom_call.1} parent=1 // pred_region
      %1656 = dma.done [#allocation6], 16
    $region69: #{tpu_custom_call.1} parent=1 // pred_fallthru
      _
    %1657 = vsyncpa [#allocation5], 1
    %1658 = vsyncpa [#allocation8], 1
    %1659 = vsyncpa [#allocation11], 1
    %1660 = vsyncpa [#allocation6], 1

</llo_original>
